<compile_context>
chip_gen: v6e
topology: v6e:2x2x1
jax: 0.10.0
libtpu: 0.0.40
codegen_flags: <defaults>
</compile_context>

<pallas_src>
import jax
import jax.numpy as jnp
from jax.experimental import pallas as pl
from jax.experimental.pallas import tpu as pltpu

INPUT_DIM = 128          # fusion_layer Linear(128*3, 256) forces 64 + 64 + 2*input_dim == 384
BN_EPS = 1e-5


def _fusion_kernel(fv_ref, fl_ref, wtap_ref, wf1a_ref, wf1b_ref, wf2_ref, wrs_ref,
                   b1_ref, b2_ref, out_ref, sum_scr, corr_scr):
    s = pl.program_id(1)
    last_s = pl.num_programs(1) - 1

    fv = fv_ref[...].astype(jnp.float32)          # (TB, TS, C)
    fl = fl_ref[...].astype(jnp.float32)
    TB, TS, C = fv.shape

    @pl.when(s == 0)
    def _init():
        sum_scr[...] = jnp.zeros_like(sum_scr)
        # conv taps at offsets +1/+2 only miss the first/second sequence rows.
        first = jnp.concatenate([fv[:, 0, :], fl[:, 0, :]], axis=-1)      # (TB, 2C)
        second = jnp.concatenate([fv[:, 1, :], fl[:, 1, :]], axis=-1)
        corr_scr[...] = (
            jnp.dot(first, wtap_ref[1], preferred_element_type=jnp.float32)
            + jnp.dot(second, wtap_ref[2], preferred_element_type=jnp.float32))

    # Per-modality sequence-sum accumulation (lane-aligned sliced stores, no concat).
    sum_scr[:, 0:C] = sum_scr[:, 0:C] + jnp.sum(fv, axis=1)
    sum_scr[:, C:2 * C] = sum_scr[:, C:2 * C] + jnp.sum(fl, axis=1)

    @pl.when(s == last_s)
    def _finalize():
        # conv taps at offsets -1/-2 only miss the last/second-to-last rows.
        last = jnp.concatenate([fv[:, TS - 1, :], fl[:, TS - 1, :]], axis=-1)
        last2 = jnp.concatenate([fv[:, TS - 2, :], fl[:, TS - 2, :]], axis=-1)
        corr = (corr_scr[...]
                + jnp.dot(last, wtap_ref[3], preferred_element_type=jnp.float32)
                + jnp.dot(last2, wtap_ref[4], preferred_element_type=jnp.float32))

        tot = sum_scr[...]                                                 # (TB, 2C)
        # mean_s(conv_k3 | conv_k5): cols 0:64 / 64:128, 1/S folded into wtap.
        scale12 = jnp.dot(tot, wtap_ref[0], preferred_element_type=jnp.float32) - corr
        # fusion_layer: Linear(+folded conv bias & eval BN) -> ReLU -> Dropout(id) -> Linear.
        # The first Linear is split over its contraction axis -> no lane concat.
        h = (jnp.dot(scale12, wf1a_ref[...], preferred_element_type=jnp.float32)
             + jnp.dot(tot, wf1b_ref[...], preferred_element_type=jnp.float32)
             + b1_ref[...])
        h = jnp.maximum(h, 0.0)
        out = (jnp.dot(h, wf2_ref[...], preferred_element_type=jnp.float32)
               + jnp.dot(tot, wrs_ref[...], preferred_element_type=jnp.float32)
               + b2_ref[...])
        out_ref[...] = jnp.maximum(out, 0.0).astype(out_ref.dtype)


def _fold_params(p, C, S):
    """Host-side algebraic folding of the torch-style parameters (exact in eval mode)."""
    C2 = 2 * C
    inv_s = 1.0 / float(S)
    w1, w2 = p["w1"], p["w2"]                     # (3, 2C, 64), (5, 2C, 64): (K, I, O)
    zeros = jnp.zeros((C2, 64), jnp.float32)

    def taps(conv3_part, conv5_part):             # -> (2C, 128): cols 0:64 conv3, 64:128 conv5
        return jnp.concatenate([conv3_part, conv5_part], axis=1)

    # mean_s conv == (1/S)[ tot@W_tot - first@W_first - second@W_second - last@W_last - last2@W_last2 ]
    w_tap = inv_s * jnp.stack([
        taps(w1[0] + w1[1] + w1[2], w2[0] + w2[1] + w2[2] + w2[3] + w2[4]),   # * tot
        taps(w1[2],                 w2[3] + w2[4]),                            # * first   (subtracted)
        taps(zeros,                 w2[4]),                                    # * second  (subtracted)
        taps(w1[0],                 w2[0] + w2[1]),                            # * last    (subtracted)
        taps(zeros,                 w2[0]),                                    # * last2   (subtracted)
    ], axis=0)                                                                 # (5, 2C, 128)

    # Eval-mode BatchNorm folded into the first Linear.
    bn_scale = p["gamma"] / jnp.sqrt(p["rvar"] + BN_EPS)                       # (1, 256)
    wf1_f = p["wf1"] * bn_scale                                                # (384, 256)
    bf1_f = (p["bf1"] - p["rmean"]) * bn_scale + p["beta"]                     # (1, 256)
    wf1_a = wf1_f[:128, :]                                                     # scale1|scale2 rows
    wf1_b = wf1_f[128:, :] * inv_s                                             # scale3 rows (fed `tot`)
    bias1 = jnp.concatenate([p["b1"], p["b2"]], axis=1) @ wf1_a + bf1_f        # conv biases folded

    wrs = p["wr"] * inv_s                                                      # residual Linear (fed `tot`)
    bias2 = p["bf2"] + p["br"]
    return w_tap, wf1_a, wf1_b, p["wf2"], wrs, bias1, bias2


def feature_fusion(fv, fl, p, *, in_vmem_budget=20 << 20):
    B, S, C = fv.shape
    assert fl.shape == (B, S, C)
    assert C == INPUT_DIM, "fusion_layer Linear(128*3, 256) implies input_dim == 128"
    assert S >= 2, "conv-tap edge-row construction requires S >= 2"

    weights = _fold_params(p, C, S)
    w_tap, wf1_a, wf1_b, wf2, wrs, bias1, bias2 = weights

    itemsize = jnp.dtype(fv.dtype).itemsize
    row_bytes = 2 * 2 * C * itemsize          # fv + fl, double-buffered, per (batch row, seq row)

    # ---- sequence tile: whole S if it fits the budget at TB=8, else a multiple-of-8 divisor ----
    if 8 * S * row_bytes <= in_vmem_budget:
        TS = S
    else:
        TS = S  # TODO(synk): huge S with no multiple-of-8 divisor falls back to whole-sequence blocks
        ts_cap = max(8, (in_vmem_budget // (8 * row_bytes)) // 8 * 8)
        for cand in range(min(ts_cap, (S // 8) * 8), 7, -8):
            if S % cand == 0:
                TS = cand
                break

    # ---- batch tile: largest multiple of 8 within budget; keep >=2 steps for v7x's 2 TCs ----
    if B <= 8:
        TB = B
    else:
        tb_cap = max(8, (in_vmem_budget // (TS * row_bytes)) // 8 * 8)
        tb_full = -(-B // 8) * 8
        tb_half = max(8, -(-((B + 1) // 2) // 8) * 8)
        TB = min(tb_full, tb_cap, tb_half)

    grid = (pl.cdiv(B, TB), pl.cdiv(S, TS))

    # Raise the scoped-VMEM limit only when the tile needs more than the smallest
    # per-generation default (16 MiB on v5e); cap well under v7x's 64 MiB physical.
    weight_bytes = 2 * sum(int(w.size) * w.dtype.itemsize for w in weights)
    scratch_bytes = (TB * 2 * C + TB * 128) * 4
    vmem_need = 2 * 2 * TB * TS * C * itemsize + 2 * TB * C * 4 + weight_bytes + scratch_bytes
    vmem_limit = None
    if vmem_need * 1.3 > (12 << 20):
        vmem_limit = min(int(vmem_need * 1.3) + (2 << 20), 48 << 20)

    def _const_spec(shape):
        return pl.BlockSpec(shape, lambda b, s, _n=len(shape): (0,) * _n)

    return pl.pallas_call(
        _fusion_kernel,
        out_shape=jax.ShapeDtypeStruct((B, C), jnp.float32),
        grid_spec=pltpu.PrefetchScalarGridSpec(
            num_scalar_prefetch=0,
            grid=grid,
            in_specs=[
                pl.BlockSpec((TB, TS, C), lambda b, s: (b, s, 0)),   # F_V
                pl.BlockSpec((TB, TS, C), lambda b, s: (b, s, 0)),   # F_L
                _const_spec(w_tap.shape),    # (5, 2C, 128) packed conv-tap weights (1/S folded)
                _const_spec(wf1_a.shape),    # (128, 256) fusion Linear, scale1|scale2 rows (BN folded)
                _const_spec(wf1_b.shape),    # (2C, 256)  fusion Linear, scale3 rows (BN + 1/S folded)
                _const_spec(wf2.shape),      # (256, C)   fusion Linear #2
                _const_spec(wrs.shape),      # (2C, C)    residual Linear (1/S folded)
                _const_spec(bias1.shape),    # (1, 256)   folded bias of fusion Linear #1
                _const_spec(bias2.shape),    # (1, C)     bf2 + br
            ],
            out_specs=pl.BlockSpec((TB, C), lambda b, s: (b, 0)),
            scratch_shapes=[
                pltpu.VMEM((TB, 2 * C), jnp.float32),   # per-modality sequence sums [sum fv | sum fl]
                pltpu.VMEM((TB, 128), jnp.float32),     # conv edge-row corrections
            ],
        ),
        compiler_params=pltpu.CompilerParams(
            dimension_semantics=("parallel", "arbitrary"),
            vmem_limit_bytes=vmem_limit),
    )(fv, fl, *weights)


# --------------------------- pure-JAX reference -------------------------------
def reference(fv, fl, p):
    comb = jnp.concatenate([fv, fl], axis=2).transpose(0, 2, 1)   # (B, 2C, S)

    def conv1d_mean(x, w_kio, b_1o, pad):
        # w_kio: (K, I, O) kernel layout -> torch layout (O, I, K)
        w = jnp.transpose(w_kio, (2, 1, 0))
        K = w.shape[2]
        S = x.shape[2]
        xp = jnp.pad(x, ((0, 0), (0, 0), (pad, pad)))
        windows = jnp.stack([xp[:, :, k:k + S] for k in range(K)], axis=-1)  # (B,I,S,K)
        out = jnp.einsum("bisk,oik->bos", windows, w) + b_1o[0][None, :, None]
        return out.mean(axis=-1)

    scale1 = conv1d_mean(comb, p["w1"], p["b1"], 1)
    scale2 = conv1d_mean(comb, p["w2"], p["b2"], 2)
    scale3 = comb.mean(axis=-1)
    fused = jnp.concatenate([scale1, scale2, scale3], axis=1)
    h = fused @ p["wf1"] + p["bf1"]
    h = (h - p["rmean"]) / jnp.sqrt(p["rvar"] + BN_EPS) * p["gamma"] + p["beta"]
    h = jnp.maximum(h, 0.0)
    fused_out = h @ p["wf2"] + p["bf2"]
    residual = jnp.concatenate([fv.mean(1), fl.mean(1)], axis=1) @ p["wr"] + p["br"]
    return jnp.maximum(fused_out + residual, 0.0)


def init_params(key, C):
    ks = jax.random.split(key, 16)

    def init(k, shape, scale=0.02):
        return scale * jax.random.normal(k, shape, dtype=jnp.float32)

    # torch Conv1d weights are (O, I, K); kernel/reference want (K, I, O).
    w1 = jnp.transpose(init(ks[0], (64, 2 * C, 3)), (2, 1, 0))
    b1 = init(ks[1], (1, 64))
    w2 = jnp.transpose(init(ks[2], (64, 2 * C, 5)), (2, 1, 0))
    b2 = init(ks[3], (1, 64))
    # torch Linear weights are (out, in); kernel/reference want (in, out).
    wf1 = jnp.transpose(init(ks[4], (256, 128 * 3)), (1, 0))
    bf1 = init(ks[5], (1, 256))
    gamma = 1.0 + init(ks[6], (1, 256))
    beta = init(ks[7], (1, 256))
    rmean = init(ks[8], (1, 256))
    rvar = 1.0 + jnp.abs(init(ks[9], (1, 256)))
    wf2 = jnp.transpose(init(ks[10], (C, 256)), (1, 0))
    bf2 = init(ks[11], (1, C))
    wr = jnp.transpose(init(ks[12], (C, 2 * C)), (1, 0))
    br = init(ks[13], (1, C))
    return dict(w1=w1, b1=b1, w2=w2, b2=b2, wf1=wf1, bf1=bf1,
                gamma=gamma, beta=beta, rmean=rmean, rvar=rvar,
                wf2=wf2, bf2=bf2, wr=wr, br=br), ks[14], ks[15]


if __name__ == "__main__":
    B, S, C = 2, 8, INPUT_DIM
    params, k_fv, k_fl = init_params(jax.random.PRNGKey(0), C)
    F_V = jax.random.normal(k_fv, (B, S, C), dtype=jnp.float32)
    F_L = jax.random.normal(k_fl, (B, S, C), dtype=jnp.float32)

    out = feature_fusion(F_V, F_L, params)
    out = jax.block_until_ready(out)

    ref = reference(F_V, F_L, params)
    assert out.shape == (B, C)
    assert jnp.allclose(out, ref, atol=2e-3, rtol=2e-3), float(jnp.max(jnp.abs(out - ref)))
    print("KERNEL_OK")
</pallas_src>

<mosaic_0001>
module attributes {stable_mosaic.version = 11 : i64} {
  func.func @_fusion_kernel(%arg0: i32, %arg1: i32, %arg2: memref<2x8x128xf32, #tpu.memory_space<vmem>>, %arg3: memref<2x8x128xf32, #tpu.memory_space<vmem>>, %arg4: memref<5x256x128xf32, #tpu.memory_space<vmem>>, %arg5: memref<128x256xf32, #tpu.memory_space<vmem>>, %arg6: memref<256x256xf32, #tpu.memory_space<vmem>>, %arg7: memref<256x128xf32, #tpu.memory_space<vmem>>, %arg8: memref<256x128xf32, #tpu.memory_space<vmem>>, %arg9: memref<1x256xf32, #tpu.memory_space<vmem>>, %arg10: memref<1x128xf32, #tpu.memory_space<vmem>>, %arg11: memref<2x128xf32, #tpu.memory_space<vmem>>, %arg12: memref<2x256xf32, #tpu.memory_space<vmem>>, %arg13: memref<2x128xf32, #tpu.memory_space<vmem>>) attributes {dimension_semantics = [#tpu.dimension_semantics<parallel>, #tpu.dimension_semantics<arbitrary>], iteration_bounds = array<i64: 1, 1>, scalar_prefetch = 0 : i64, scratch_operands = 2 : i64, tpu.core_type = #tpu.core_type<tc>, window_params = [{transform_indices = @transform_0, window_bounds = array<i64: 2, 8, 128>}, {transform_indices = @transform_1, window_bounds = array<i64: 2, 8, 128>}, {pipeline_mode = #tpu.pipeline_mode<synchronous>, transform_indices = @transform_2, window_bounds = array<i64: 5, 256, 128>}, {pipeline_mode = #tpu.pipeline_mode<synchronous>, transform_indices = @transform_3, window_bounds = array<i64: 128, 256>}, {pipeline_mode = #tpu.pipeline_mode<synchronous>, transform_indices = @transform_4, window_bounds = array<i64: 256, 256>}, {pipeline_mode = #tpu.pipeline_mode<synchronous>, transform_indices = @transform_5, window_bounds = array<i64: 256, 128>}, {pipeline_mode = #tpu.pipeline_mode<synchronous>, transform_indices = @transform_6, window_bounds = array<i64: 256, 128>}, {pipeline_mode = #tpu.pipeline_mode<synchronous>, transform_indices = @transform_7, window_bounds = array<i64: 1, 256>}, {pipeline_mode = #tpu.pipeline_mode<synchronous>, transform_indices = @transform_8, window_bounds = array<i64: 1, 128>}, {transform_indices = @transform_9, window_bounds = array<i64: 2, 128>}]} {
    %c0 = arith.constant 0 : index
    %c0_0 = arith.constant 0 : index
    %c0_1 = arith.constant 0 : index
    %0 = vector.load %arg2[%c0, %c0_0, %c0_1] : memref<2x8x128xf32, #tpu.memory_space<vmem>>, vector<2x8x128xf32>
    %c0_2 = arith.constant 0 : index
    %c0_3 = arith.constant 0 : index
    %c0_4 = arith.constant 0 : index
    %1 = vector.load %arg3[%c0_2, %c0_3, %c0_4] : memref<2x8x128xf32, #tpu.memory_space<vmem>>, vector<2x8x128xf32>
    %c0_i32 = arith.constant 0 : i32
    %2 = arith.cmpi eq, %arg1, %c0_i32 : i32
    %3 = arith.extui %2 : i1 to i32
    %c0_i32_5 = arith.constant 0 : i32
    %4 = arith.cmpi ne, %3, %c0_i32_5 : i32
    scf.if %4 {
      %cst_16 = arith.constant 0.000000e+00 : f32
      %16 = vector.broadcast %cst_16 : f32 to vector<2x256xf32>
      %c0_17 = arith.constant 0 : index
      %c0_18 = arith.constant 0 : index
      %17 = vector.load %arg12[%c0_17, %c0_18] : memref<2x256xf32, #tpu.memory_space<vmem>>, vector<2x256xf32>
      tpu.vector_store %arg12[%c0_17, %c0_18], %16 {strides = array<i32>} : memref<2x256xf32, #tpu.memory_space<vmem>>, vector<2x256xf32>,
      %18 = vector.extract_strided_slice %0 {offsets = [0, 0, 0], sizes = [2, 1, 128], strides = [1, 1, 1]} : vector<2x8x128xf32> to vector<2x1x128xf32>
      %19 = vector.shape_cast %18 : vector<2x1x128xf32> to vector<2x128xf32>
      %20 = vector.extract_strided_slice %1 {offsets = [0, 0, 0], sizes = [2, 1, 128], strides = [1, 1, 1]} : vector<2x8x128xf32> to vector<2x1x128xf32>
      %21 = vector.shape_cast %20 : vector<2x1x128xf32> to vector<2x128xf32>
      %22 = tpu.concatenate %19, %21 in 1 : vector<2x128xf32>, vector<2x128xf32> -> vector<2x256xf32>
      %23 = vector.extract_strided_slice %0 {offsets = [0, 1, 0], sizes = [2, 1, 128], strides = [1, 1, 1]} : vector<2x8x128xf32> to vector<2x1x128xf32>
      %24 = vector.shape_cast %23 : vector<2x1x128xf32> to vector<2x128xf32>
      %25 = vector.extract_strided_slice %1 {offsets = [0, 1, 0], sizes = [2, 1, 128], strides = [1, 1, 1]} : vector<2x8x128xf32> to vector<2x1x128xf32>
      %26 = vector.shape_cast %25 : vector<2x1x128xf32> to vector<2x128xf32>
      %27 = tpu.concatenate %24, %26 in 1 : vector<2x128xf32>, vector<2x128xf32> -> vector<2x256xf32>
      %c1 = arith.constant 1 : index
      %c0_19 = arith.constant 0 : index
      %c0_20 = arith.constant 0 : index
      %28 = vector.load %arg4[%c1, %c0_19, %c0_20] : memref<5x256x128xf32, #tpu.memory_space<vmem>>, vector<1x256x128xf32>
      %29 = vector.shape_cast %28 : vector<1x256x128xf32> to vector<256x128xf32>
      %cst_21 = arith.constant dense<0.000000e+00> : vector<2x128xf32>
      %30 = tpu.matmul %22, %29, %cst_21 {dimension_numbers = #tpu.dot_dimension_numbers<[1], [0], [0], [1], [0, 0, 1, 1], [], []>} : vector<2x256xf32>, vector<256x128xf32>, vector<2x128xf32> -> vector<2x128xf32>
      %c2 = arith.constant 2 : index
      %c0_22 = arith.constant 0 : index
      %c0_23 = arith.constant 0 : index
      %31 = vector.load %arg4[%c2, %c0_22, %c0_23] : memref<5x256x128xf32, #tpu.memory_space<vmem>>, vector<1x256x128xf32>
      %32 = vector.shape_cast %31 : vector<1x256x128xf32> to vector<256x128xf32>
      %cst_24 = arith.constant dense<0.000000e+00> : vector<2x128xf32>
      %33 = tpu.matmul %27, %32, %cst_24 {dimension_numbers = #tpu.dot_dimension_numbers<[1], [0], [0], [1], [0, 0, 1, 1], [], []>} : vector<2x256xf32>, vector<256x128xf32>, vector<2x128xf32> -> vector<2x128xf32>
      %34 = arith.addf %30, %33 : vector<2x128xf32>
      %c0_25 = arith.constant 0 : index
      %c0_26 = arith.constant 0 : index
      %35 = vector.load %arg13[%c0_25, %c0_26] : memref<2x128xf32, #tpu.memory_space<vmem>>, vector<2x128xf32>
      tpu.vector_store %arg13[%c0_25, %c0_26], %34 {strides = array<i32>} : memref<2x128xf32, #tpu.memory_space<vmem>>, vector<2x128xf32>,
    } else {
    }
    %c0_6 = arith.constant 0 : index
    %c0_7 = arith.constant 0 : index
    %5 = vector.load %arg12[%c0_6, %c0_7] : memref<2x256xf32, #tpu.memory_space<vmem>>, vector<2x128xf32>
    %cst = arith.constant dense<0.000000e+00> : vector<2x128xf32>
    %6 = vector.multi_reduction <add>, %0, %cst [1] : vector<2x8x128xf32> to vector<2x128xf32>
    %7 = arith.addf %5, %6 : vector<2x128xf32>
    %c0_8 = arith.constant 0 : index
    %c0_9 = arith.constant 0 : index
    %8 = vector.load %arg12[%c0_8, %c0_9] : memref<2x256xf32, #tpu.memory_space<vmem>>, vector<2x128xf32>
    tpu.vector_store %arg12[%c0_8, %c0_9], %7 {strides = array<i32>} : memref<2x256xf32, #tpu.memory_space<vmem>>, vector<2x128xf32>,
    %c0_10 = arith.constant 0 : index
    %c128 = arith.constant 128 : index
    %9 = vector.load %arg12[%c0_10, %c128] : memref<2x256xf32, #tpu.memory_space<vmem>>, vector<2x128xf32>
    %cst_11 = arith.constant dense<0.000000e+00> : vector<2x128xf32>
    %10 = vector.multi_reduction <add>, %1, %cst_11 [1] : vector<2x8x128xf32> to vector<2x128xf32>
    %11 = arith.addf %9, %10 : vector<2x128xf32>
    %c0_12 = arith.constant 0 : index
    %c128_13 = arith.constant 128 : index
    %12 = vector.load %arg12[%c0_12, %c128_13] : memref<2x256xf32, #tpu.memory_space<vmem>>, vector<2x128xf32>
    tpu.vector_store %arg12[%c0_12, %c128_13], %11 {strides = array<i32>} : memref<2x256xf32, #tpu.memory_space<vmem>>, vector<2x128xf32>,
    %c0_i32_14 = arith.constant 0 : i32
    %13 = arith.cmpi eq, %arg1, %c0_i32_14 : i32
    %14 = arith.extui %13 : i1 to i32
    %c0_i32_15 = arith.constant 0 : i32
    %15 = arith.cmpi ne, %14, %c0_i32_15 : i32
    scf.if %15 {
      %16 = vector.extract_strided_slice %0 {offsets = [0, 7, 0], sizes = [2, 1, 128], strides = [1, 1, 1]} : vector<2x8x128xf32> to vector<2x1x128xf32>
      %17 = vector.shape_cast %16 : vector<2x1x128xf32> to vector<2x128xf32>
      %18 = vector.extract_strided_slice %1 {offsets = [0, 7, 0], sizes = [2, 1, 128], strides = [1, 1, 1]} : vector<2x8x128xf32> to vector<2x1x128xf32>
      %19 = vector.shape_cast %18 : vector<2x1x128xf32> to vector<2x128xf32>
      %20 = tpu.concatenate %17, %19 in 1 : vector<2x128xf32>, vector<2x128xf32> -> vector<2x256xf32>
      %21 = vector.extract_strided_slice %0 {offsets = [0, 6, 0], sizes = [2, 1, 128], strides = [1, 1, 1]} : vector<2x8x128xf32> to vector<2x1x128xf32>
      %22 = vector.shape_cast %21 : vector<2x1x128xf32> to vector<2x128xf32>
      %23 = vector.extract_strided_slice %1 {offsets = [0, 6, 0], sizes = [2, 1, 128], strides = [1, 1, 1]} : vector<2x8x128xf32> to vector<2x1x128xf32>
      %24 = vector.shape_cast %23 : vector<2x1x128xf32> to vector<2x128xf32>
      %25 = tpu.concatenate %22, %24 in 1 : vector<2x128xf32>, vector<2x128xf32> -> vector<2x256xf32>
      %c0_16 = arith.constant 0 : index
      %c0_17 = arith.constant 0 : index
      %26 = vector.load %arg13[%c0_16, %c0_17] : memref<2x128xf32, #tpu.memory_space<vmem>>, vector<2x128xf32>
      %c3 = arith.constant 3 : index
      %c0_18 = arith.constant 0 : index
      %c0_19 = arith.constant 0 : index
      %27 = vector.load %arg4[%c3, %c0_18, %c0_19] : memref<5x256x128xf32, #tpu.memory_space<vmem>>, vector<1x256x128xf32>
      %28 = vector.shape_cast %27 : vector<1x256x128xf32> to vector<256x128xf32>
      %cst_20 = arith.constant dense<0.000000e+00> : vector<2x128xf32>
      %29 = tpu.matmul %20, %28, %cst_20 {dimension_numbers = #tpu.dot_dimension_numbers<[1], [0], [0], [1], [0, 0, 1, 1], [], []>} : vector<2x256xf32>, vector<256x128xf32>, vector<2x128xf32> -> vector<2x128xf32>
      %30 = arith.addf %26, %29 : vector<2x128xf32>
      %c4 = arith.constant 4 : index
      %c0_21 = arith.constant 0 : index
      %c0_22 = arith.constant 0 : index
      %31 = vector.load %arg4[%c4, %c0_21, %c0_22] : memref<5x256x128xf32, #tpu.memory_space<vmem>>, vector<1x256x128xf32>
      %32 = vector.shape_cast %31 : vector<1x256x128xf32> to vector<256x128xf32>
      %cst_23 = arith.constant dense<0.000000e+00> : vector<2x128xf32>
      %33 = tpu.matmul %25, %32, %cst_23 {dimension_numbers = #tpu.dot_dimension_numbers<[1], [0], [0], [1], [0, 0, 1, 1], [], []>} : vector<2x256xf32>, vector<256x128xf32>, vector<2x128xf32> -> vector<2x128xf32>
      %34 = arith.addf %30, %33 : vector<2x128xf32>
      %c0_24 = arith.constant 0 : index
      %c0_25 = arith.constant 0 : index
      %35 = vector.load %arg12[%c0_24, %c0_25] : memref<2x256xf32, #tpu.memory_space<vmem>>, vector<2x256xf32>
      %c0_26 = arith.constant 0 : index
      %c0_27 = arith.constant 0 : index
      %c0_28 = arith.constant 0 : index
      %36 = vector.load %arg4[%c0_26, %c0_27, %c0_28] : memref<5x256x128xf32, #tpu.memory_space<vmem>>, vector<1x256x128xf32>
      %37 = vector.shape_cast %36 : vector<1x256x128xf32> to vector<256x128xf32>
      %cst_29 = arith.constant dense<0.000000e+00> : vector<2x128xf32>
      %38 = tpu.matmul %35, %37, %cst_29 {dimension_numbers = #tpu.dot_dimension_numbers<[1], [0], [0], [1], [0, 0, 1, 1], [], []>} : vector<2x256xf32>, vector<256x128xf32>, vector<2x128xf32> -> vector<2x128xf32>
      %39 = arith.subf %38, %34 : vector<2x128xf32>
      %c0_30 = arith.constant 0 : index
      %c0_31 = arith.constant 0 : index
      %40 = vector.load %arg5[%c0_30, %c0_31] : memref<128x256xf32, #tpu.memory_space<vmem>>, vector<128x256xf32>
      %cst_32 = arith.constant dense<0.000000e+00> : vector<2x256xf32>
      %41 = tpu.matmul %39, %40, %cst_32 {dimension_numbers = #tpu.dot_dimension_numbers<[1], [0], [0], [1], [0, 0, 1, 1], [], []>} : vector<2x128xf32>, vector<128x256xf32>, vector<2x256xf32> -> vector<2x256xf32>
      %c0_33 = arith.constant 0 : index
      %c0_34 = arith.constant 0 : index
      %42 = vector.load %arg6[%c0_33, %c0_34] : memref<256x256xf32, #tpu.memory_space<vmem>>, vector<256x256xf32>
      %cst_35 = arith.constant dense<0.000000e+00> : vector<2x256xf32>
      %43 = tpu.matmul %35, %42, %cst_35 {dimension_numbers = #tpu.dot_dimension_numbers<[1], [0], [0], [1], [0, 0, 1, 1], [], []>} : vector<2x256xf32>, vector<256x256xf32>, vector<2x256xf32> -> vector<2x256xf32>
      %44 = arith.addf %41, %43 : vector<2x256xf32>
      %c0_36 = arith.constant 0 : index
      %c0_37 = arith.constant 0 : index
      %45 = vector.load %arg9[%c0_36, %c0_37] : memref<1x256xf32, #tpu.memory_space<vmem>>, vector<1x256xf32>
      %46 = vector.broadcast %45 : vector<1x256xf32> to vector<2x256xf32>
      %47 = arith.addf %44, %46 : vector<2x256xf32>
      %cst_38 = arith.constant 0.000000e+00 : f32
      %48 = vector.broadcast %cst_38 : f32 to vector<2x256xf32>
      %49 = arith.maximumf %47, %48 : vector<2x256xf32>
      %c0_39 = arith.constant 0 : index
      %c0_40 = arith.constant 0 : index
      %50 = vector.load %arg7[%c0_39, %c0_40] : memref<256x128xf32, #tpu.memory_space<vmem>>, vector<256x128xf32>
      %cst_41 = arith.constant dense<0.000000e+00> : vector<2x128xf32>
      %51 = tpu.matmul %49, %50, %cst_41 {dimension_numbers = #tpu.dot_dimension_numbers<[1], [0], [0], [1], [0, 0, 1, 1], [], []>} : vector<2x256xf32>, vector<256x128xf32>, vector<2x128xf32> -> vector<2x128xf32>
      %c0_42 = arith.constant 0 : index
      %c0_43 = arith.constant 0 : index
      %52 = vector.load %arg8[%c0_42, %c0_43] : memref<256x128xf32, #tpu.memory_space<vmem>>, vector<256x128xf32>
      %cst_44 = arith.constant dense<0.000000e+00> : vector<2x128xf32>
      %53 = tpu.matmul %35, %52, %cst_44 {dimension_numbers = #tpu.dot_dimension_numbers<[1], [0], [0], [1], [0, 0, 1, 1], [], []>} : vector<2x256xf32>, vector<256x128xf32>, vector<2x128xf32> -> vector<2x128xf32>
      %54 = arith.addf %51, %53 : vector<2x128xf32>
      %c0_45 = arith.constant 0 : index
      %c0_46 = arith.constant 0 : index
      %55 = vector.load %arg10[%c0_45, %c0_46] : memref<1x128xf32, #tpu.memory_space<vmem>>, vector<1x128xf32>
      %56 = vector.broadcast %55 : vector<1x128xf32> to vector<2x128xf32>
      %57 = arith.addf %54, %56 : vector<2x128xf32>
      %cst_47 = arith.constant 0.000000e+00 : f32
      %58 = vector.broadcast %cst_47 : f32 to vector<2x128xf32>
      %59 = arith.maximumf %57, %58 : vector<2x128xf32>
      %c0_48 = arith.constant 0 : index
      %c0_49 = arith.constant 0 : index
      %60 = vector.load %arg11[%c0_48, %c0_49] : memref<2x128xf32, #tpu.memory_space<vmem>>, vector<2x128xf32>
      tpu.vector_store %arg11[%c0_48, %c0_49], %59 {strides = array<i32>} : memref<2x128xf32, #tpu.memory_space<vmem>>, vector<2x128xf32>,
    } else {
    }
    return
  }
  func.func @transform_0(%arg0: i32, %arg1: i32) -> (i32, i32, i32) {
    %c0_i32 = arith.constant 0 : i32
    %c0_i32_0 = arith.constant 0 : i32
    return %arg0, %arg1, %c0_i32 : i32, i32, i32
  }
  func.func @transform_1(%arg0: i32, %arg1: i32) -> (i32, i32, i32) {
    %c0_i32 = arith.constant 0 : i32
    %c0_i32_0 = arith.constant 0 : i32
    return %arg0, %arg1, %c0_i32 : i32, i32, i32
  }
  func.func @transform_2(%arg0: i32, %arg1: i32) -> (i32, i32, i32) {
    %c0_i32 = arith.constant 0 : i32
    %c0_i32_0 = arith.constant 0 : i32
    %c0_i32_1 = arith.constant 0 : i32
    %c0_i32_2 = arith.constant 0 : i32
    return %c0_i32, %c0_i32_0, %c0_i32_1 : i32, i32, i32
  }
  func.func @transform_3(%arg0: i32, %arg1: i32) -> (i32, i32) {
    %c0_i32 = arith.constant 0 : i32
    %c0_i32_0 = arith.constant 0 : i32
    %c0_i32_1 = arith.constant 0 : i32
    return %c0_i32, %c0_i32_0 : i32, i32
  }
  func.func @transform_4(%arg0: i32, %arg1: i32) -> (i32, i32) {
    %c0_i32 = arith.constant 0 : i32
    %c0_i32_0 = arith.constant 0 : i32
    %c0_i32_1 = arith.constant 0 : i32
    return %c0_i32, %c0_i32_0 : i32, i32
  }
  func.func @transform_5(%arg0: i32, %arg1: i32) -> (i32, i32) {
    %c0_i32 = arith.constant 0 : i32
    %c0_i32_0 = arith.constant 0 : i32
    %c0_i32_1 = arith.constant 0 : i32
    return %c0_i32, %c0_i32_0 : i32, i32
  }
  func.func @transform_6(%arg0: i32, %arg1: i32) -> (i32, i32) {
    %c0_i32 = arith.constant 0 : i32
    %c0_i32_0 = arith.constant 0 : i32
    %c0_i32_1 = arith.constant 0 : i32
    return %c0_i32, %c0_i32_0 : i32, i32
  }
  func.func @transform_7(%arg0: i32, %arg1: i32) -> (i32, i32) {
    %c0_i32 = arith.constant 0 : i32
    %c0_i32_0 = arith.constant 0 : i32
    %c0_i32_1 = arith.constant 0 : i32
    return %c0_i32, %c0_i32_0 : i32, i32
  }
  func.func @transform_8(%arg0: i32, %arg1: i32) -> (i32, i32) {
    %c0_i32 = arith.constant 0 : i32
    %c0_i32_0 = arith.constant 0 : i32
    %c0_i32_1 = arith.constant 0 : i32
    return %c0_i32, %c0_i32_0 : i32, i32
  }
  func.func @transform_9(%arg0: i32, %arg1: i32) -> (i32, i32) {
    %c0_i32 = arith.constant 0 : i32
    %c0_i32_0 = arith.constant 0 : i32
    return %arg0, %c0_i32 : i32, i32
  }
}

</mosaic_0001>

<llo_original>
// kernel: tpu_custom_call.1
$region0: #{tpu_custom_call.1}
  #allocation0 [shape = 'u32[]', space=smem, size = 0x4, offset = 0x4, fixed_abs, tag = 'smem constant byte address 0x4 - core index']
  #allocation1 [shape = 'u32[144,128]{1,0:T(1,128)}', space=vmem, size = 0x12000, scoped, tag = 'internal scratch']
  #allocation2 [shape = 'f32[2,256]{1,0:T(2,128)}', space=vmem, size = 0x800, scoped, tag = 'scratch operand']
  #allocation3 [shape = 'f32[2,128]{1,0:T(2,128)}', space=vmem, size = 0x400, scoped, tag = 'scratch operand']
  %s0 = inlined_call_operand.hbm [shape: f32[2,8,128], index: 0, kind: input, shape index: {}]
  %s1 = inlined_call_operand.hbm [shape: f32[2,8,128], index: 1, kind: input, shape index: {}]
  %s2 = inlined_call_operand.hbm [shape: f32[5,256,128], index: 2, kind: input, shape index: {}]
  %s3 = inlined_call_operand.hbm [shape: f32[128,256], index: 3, kind: input, shape index: {}]
  %s4 = inlined_call_operand.hbm [shape: f32[256,256], index: 4, kind: input, shape index: {}]
  %s5 = inlined_call_operand.hbm [shape: f32[256,128], index: 5, kind: input, shape index: {}]
  %s6 = inlined_call_operand.hbm [shape: f32[256,128], index: 6, kind: input, shape index: {}]
  %s7 = inlined_call_operand.vmem [shape: f32[1,256], index: 7, kind: input, shape index: {}]
  %s8 = inlined_call_operand.vmem [shape: f32[1,128], index: 8, kind: input, shape index: {}]
  %s9 = inlined_call_operand.hbm [shape: f32[2,128], index: 9, kind: output, shape index: {}]
  %s10 = sld [smem:[#allocation0]]
  $region82: #{tpu_custom_call.1} parent=0
    _
  %s12 = ssub.s32 1, %s10
  %s13 = scalar_select 0, %s12, %s10
  $region1: #{tpu_custom_call.1} parent=0
    #allocation4 [shape = 'u8[8192]{0}', space=vmem, size = 0x2000, scoped, tag = 'input window, operand 0, single buffered']
    #allocation5 [shape = 's32[1]{0}', space=sflag, size = 0x4, scoped, tag = 'scoped memory for tpu_custom_call.1']
    #allocation6 [shape = 's32[1]{0}', space=sflag, size = 0x4, scoped, tag = 'scoped memory for tpu_custom_call.1']
    #allocation7 [shape = 'u8[8192]{0}', space=vmem, size = 0x2000, scoped, tag = 'input window, operand 1, single buffered']
    #allocation8 [shape = 's32[1]{0}', space=sflag, size = 0x4, scoped, tag = 'scoped memory for tpu_custom_call.1']
    #allocation9 [shape = 'u8[655360]{0}', space=vmem, size = 0xa0000, scoped, tag = 'input window, operand 2, single buffered']
    #allocation10 [shape = 'u8[131072]{0}', space=vmem, size = 0x20000, scoped, tag = 'input window, operand 3, single buffered']
    #allocation11 [shape = 's32[1]{0}', space=sflag, size = 0x4, scoped, tag = 'scoped memory for tpu_custom_call.1']
    #allocation12 [shape = 'u8[262144]{0}', space=vmem, size = 0x40000, scoped, tag = 'input window, operand 4, single buffered']
    #allocation13 [shape = 'u8[131072]{0}', space=vmem, size = 0x20000, scoped, tag = 'input window, operand 5, single buffered']
    #allocation14 [shape = 's32[1]{0}', space=sflag, size = 0x4, scoped, tag = 'scoped memory for tpu_custom_call.1']
    #allocation15 [shape = 'u8[131072]{0}', space=vmem, size = 0x20000, scoped, tag = 'input window, operand 6, single buffered']
    #allocation16 [shape = 'u8[1024]{0}', space=vmem, size = 0x400, scoped, tag = 'output window, operand 0, single buffered']
    %14 = vsyncpa [#allocation5], 0
    %15 = vsyncpa [#allocation8], 0
    %16 = vsyncpa [#allocation11], 0
    %17 = vsyncpa [#allocation14], 0
    %18 = vsyncpa [#allocation6], 0
    // Predicated region
    $region2: #{tpu_custom_call.1} parent=1 // pred_check
      _
    $region3: #{tpu_custom_call.1} parent=1 // pred_check_branch
      %20 = sbr.rel (0) target = $region5
    $region4: #{tpu_custom_call.1} parent=1 // pred_region
      %s22 = ssub.s32 256, 256
      %23 = vsyncadd [#allocation5], %s22
      %s24 = sshll.u32 [#allocation4], 4
      %s25 = int_to_ptr.vmem [resolvable:$true] %s24
      %30 = dma.hbm_to_vmem [thread:$0]  %s0, 256, %s25, [#allocation5], 128, 128, 8
    $region5: #{tpu_custom_call.1} parent=1 // pred_fallthru
      _
    // Predicated region
    $region6: #{tpu_custom_call.1} parent=1 // pred_check
      _
    $region7: #{tpu_custom_call.1} parent=1 // pred_check_branch
      %32 = sbr.rel (0) target = $region9
    $region8: #{tpu_custom_call.1} parent=1 // pred_region
      %s34 = ssub.s32 256, 256
      %35 = vsyncadd [#allocation8], %s34
      %s36 = sshll.u32 [#allocation7], 4
      %s37 = int_to_ptr.vmem [resolvable:$true] %s36
      %42 = dma.hbm_to_vmem [thread:$0]  %s1, 256, %s37, [#allocation8], 128, 128, 8
    $region9: #{tpu_custom_call.1} parent=1 // pred_fallthru
      _
    // Predicated region
    $region10: #{tpu_custom_call.1} parent=1 // pred_check
      _
    $region11: #{tpu_custom_call.1} parent=1 // pred_check_branch
      %44 = sbr.rel (0) target = $region13
    $region12: #{tpu_custom_call.1} parent=1 // pred_region
      %s46 = ssub.s32 20480, 20480
      %47 = vsyncadd [#allocation8], %s46
      %s48 = sshll.u32 [#allocation9], 4
      %s49 = int_to_ptr.vmem [resolvable:$true] %s48
      %54 = dma.hbm_to_vmem [thread:$0]  %s2, 20480, %s49, [#allocation8], 128, 128, 8
    $region13: #{tpu_custom_call.1} parent=1 // pred_fallthru
      _
    // Predicated region
    $region14: #{tpu_custom_call.1} parent=1 // pred_check
      _
    $region15: #{tpu_custom_call.1} parent=1 // pred_check_branch
      %56 = sbr.rel (0) target = $region17
    $region16: #{tpu_custom_call.1} parent=1 // pred_region
      %s58 = ssub.s32 4096, 4096
      %59 = vsyncadd [#allocation11], %s58
      %s60 = sshll.u32 [#allocation10], 4
      %s61 = int_to_ptr.vmem [resolvable:$true] %s60
      %66 = dma.hbm_to_vmem [thread:$0]  %s3, 4096, %s61, [#allocation11], 256, 256, 16
    $region17: #{tpu_custom_call.1} parent=1 // pred_fallthru
      _
    // Predicated region
    $region18: #{tpu_custom_call.1} parent=1 // pred_check
      _
    $region19: #{tpu_custom_call.1} parent=1 // pred_check_branch
      %68 = sbr.rel (0) target = $region21
    $region20: #{tpu_custom_call.1} parent=1 // pred_region
      %s70 = ssub.s32 8192, 8192
      %71 = vsyncadd [#allocation11], %s70
      %s72 = sshll.u32 [#allocation12], 4
      %s73 = int_to_ptr.vmem [resolvable:$true] %s72
      %78 = dma.hbm_to_vmem [thread:$0]  %s4, 8192, %s73, [#allocation11], 256, 256, 16
    $region21: #{tpu_custom_call.1} parent=1 // pred_fallthru
      _
    // Predicated region
    $region22: #{tpu_custom_call.1} parent=1 // pred_check
      _
    $region23: #{tpu_custom_call.1} parent=1 // pred_check_branch
      %80 = sbr.rel (0) target = $region25
    $region24: #{tpu_custom_call.1} parent=1 // pred_region
      %s82 = ssub.s32 4096, 4096
      %83 = vsyncadd [#allocation14], %s82
      %s84 = sshll.u32 [#allocation13], 4
      %s85 = int_to_ptr.vmem [resolvable:$true] %s84
      %90 = dma.hbm_to_vmem [thread:$0]  %s5, 4096, %s85, [#allocation14], 128, 128, 8
    $region25: #{tpu_custom_call.1} parent=1 // pred_fallthru
      _
    // Predicated region
    $region26: #{tpu_custom_call.1} parent=1 // pred_check
      _
    $region27: #{tpu_custom_call.1} parent=1 // pred_check_branch
      %92 = sbr.rel (0) target = $region29
    $region28: #{tpu_custom_call.1} parent=1 // pred_region
      %s94 = ssub.s32 4096, 4096
      %95 = vsyncadd [#allocation14], %s94
      %s96 = sshll.u32 [#allocation15], 4
      %s97 = int_to_ptr.vmem [resolvable:$true] %s96
      %102 = dma.hbm_to_vmem [thread:$0]  %s6, 4096, %s97, [#allocation14], 128, 128, 8
    $region29: #{tpu_custom_call.1} parent=1 // pred_fallthru
      _
    // Predicated region
    $region30: #{tpu_custom_call.1} parent=1 // pred_check
      _
    $region31: #{tpu_custom_call.1} parent=1 // pred_check_branch
      %104 = sbr.rel (0) target = $region33
    $region32: #{tpu_custom_call.1} parent=1 // pred_region
      _
    $region33: #{tpu_custom_call.1} parent=1 // pred_fallthru
      _
    // Predicated region
    $region34: #{tpu_custom_call.1} parent=1 // pred_check
      _
    $region35: #{tpu_custom_call.1} parent=1 // pred_check_branch
      %106 = sbr.rel (0) target = $region37
    $region36: #{tpu_custom_call.1} parent=1 // pred_region
      _
    $region37: #{tpu_custom_call.1} parent=1 // pred_fallthru
      _
    // Predicated region
    $region38: #{tpu_custom_call.1} parent=1 // pred_check
      _
    $region39: #{tpu_custom_call.1} parent=1 // pred_check_branch
      %108 = sbr.rel (0) target = $region41
    $region40: #{tpu_custom_call.1} parent=1 // pred_region
      %109 = dma.done [#allocation5], 256
    $region41: #{tpu_custom_call.1} parent=1 // pred_fallthru
      _
    // Predicated region
    $region42: #{tpu_custom_call.1} parent=1 // pred_check
      _
    $region43: #{tpu_custom_call.1} parent=1 // pred_check_branch
      %111 = sbr.rel (0) target = $region45
    $region44: #{tpu_custom_call.1} parent=1 // pred_region
      %112 = dma.done [#allocation8], 256
    $region45: #{tpu_custom_call.1} parent=1 // pred_fallthru
      _
    // Predicated region
    $region46: #{tpu_custom_call.1} parent=1 // pred_check
      _
    $region47: #{tpu_custom_call.1} parent=1 // pred_check_branch
      %114 = sbr.rel (0) target = $region49
    $region48: #{tpu_custom_call.1} parent=1 // pred_region
      %115 = dma.done [#allocation8], 20480
    $region49: #{tpu_custom_call.1} parent=1 // pred_fallthru
      _
    // Predicated region
    $region50: #{tpu_custom_call.1} parent=1 // pred_check
      _
    $region51: #{tpu_custom_call.1} parent=1 // pred_check_branch
      %117 = sbr.rel (0) target = $region53
    $region52: #{tpu_custom_call.1} parent=1 // pred_region
      %118 = dma.done [#allocation11], 4096
    $region53: #{tpu_custom_call.1} parent=1 // pred_fallthru
      _
    // Predicated region
    $region54: #{tpu_custom_call.1} parent=1 // pred_check
      _
    $region55: #{tpu_custom_call.1} parent=1 // pred_check_branch
      %120 = sbr.rel (0) target = $region57
    $region56: #{tpu_custom_call.1} parent=1 // pred_region
      %121 = dma.done [#allocation11], 8192
    $region57: #{tpu_custom_call.1} parent=1 // pred_fallthru
      _
    // Predicated region
    $region58: #{tpu_custom_call.1} parent=1 // pred_check
      _
    $region59: #{tpu_custom_call.1} parent=1 // pred_check_branch
      %123 = sbr.rel (0) target = $region61
    $region60: #{tpu_custom_call.1} parent=1 // pred_region
      %124 = dma.done [#allocation14], 4096
    $region61: #{tpu_custom_call.1} parent=1 // pred_fallthru
      _
    // Predicated region
    $region62: #{tpu_custom_call.1} parent=1 // pred_check
      _
    $region63: #{tpu_custom_call.1} parent=1 // pred_check_branch
      %126 = sbr.rel (0) target = $region65
    $region64: #{tpu_custom_call.1} parent=1 // pred_region
      %127 = dma.done [#allocation14], 4096
    $region65: #{tpu_custom_call.1} parent=1 // pred_fallthru
      _
    %v128 = vld [vmem:[#allocation4] sm:$0xff]
    %v129 = vld [vmem:[#allocation4 + $0x8] sm:$0xff]
    %v130 = vld [vmem:[#allocation7] sm:$0xff]
    %v131 = vld [vmem:[#allocation7 + $0x8] sm:$0xff]
    %p132 = scmp.eq.s32.totalorder 0, 0
    // Predicated region
    $region66: #{tpu_custom_call.1} parent=1 // pred_check
      %p133 = pneg %p132
    $region67: #{tpu_custom_call.1} parent=1 // pred_check_branch
      %135 = sbr.rel (%p133) target = $region69
    $region68: #{tpu_custom_call.1} parent=1 // pred_region
      %136 = vst [vmem:[#allocation2] sm:$0xf] 0.0
      %v139 = vrot.slane %v129, 7
      %vm140 = vcmask 1041409
      %v141 = vsel %vm140, %v139, %v128
      %v145 = vrot.slane %v131, 7
      %v146 = vsel %vm140, %v145, %v130
      %vm148 = vcmask 1042434
      %v149 = vsel %vm148, %v139, %v128
      %v150 = vsel %vm148, %v145, %v130
      %s151 = scalar_lea.vmem [#allocation9], 256
      %v152 = vld [vmem:[%s151] sm:$0xff]
      %v153 = vld [vmem:[%s151 + $0x8] sm:$0xff]
      %v154 = vld [vmem:[%s151 + $0x10] sm:$0xff]
      %v155 = vld [vmem:[%s151 + $0x18] sm:$0xff]
      %v156 = vld [vmem:[%s151 + $0x20] sm:$0xff]
      %v157 = vld [vmem:[%s151 + $0x28] sm:$0xff]
      %v158 = vld [vmem:[%s151 + $0x30] sm:$0xff]
      %v159 = vld [vmem:[%s151 + $0x38] sm:$0xff]
      %v160 = vld [vmem:[%s151 + $0x40] sm:$0xff]
      %v161 = vld [vmem:[%s151 + $0x48] sm:$0xff]
      %v162 = vld [vmem:[%s151 + $0x50] sm:$0xff]
      %v163 = vld [vmem:[%s151 + $0x58] sm:$0xff]
      %v164 = vld [vmem:[%s151 + $0x60] sm:$0xff]
      %v165 = vld [vmem:[%s151 + $0x68] sm:$0xff]
      %v166 = vld [vmem:[%s151 + $0x70] sm:$0xff]
      %v167 = vld [vmem:[%s151 + $0x78] sm:$0xff]
      %v168 = vld [vmem:[%s151 + $0x80] sm:$0xff]
      %v169 = vld [vmem:[%s151 + $0x88] sm:$0xff]
      %v170 = vld [vmem:[%s151 + $0x90] sm:$0xff]
      %v171 = vld [vmem:[%s151 + $0x98] sm:$0xff]
      %v172 = vld [vmem:[%s151 + $0xa0] sm:$0xff]
      %v173 = vld [vmem:[%s151 + $0xa8] sm:$0xff]
      %v174 = vld [vmem:[%s151 + $0xb0] sm:$0xff]
      %v175 = vld [vmem:[%s151 + $0xb8] sm:$0xff]
      %v176 = vld [vmem:[%s151 + $0xc0] sm:$0xff]
      %v177 = vld [vmem:[%s151 + $0xc8] sm:$0xff]
      %v178 = vld [vmem:[%s151 + $0xd0] sm:$0xff]
      %v179 = vld [vmem:[%s151 + $0xd8] sm:$0xff]
      %v180 = vld [vmem:[%s151 + $0xe0] sm:$0xff]
      %v181 = vld [vmem:[%s151 + $0xe8] sm:$0xff]
      %v182 = vld [vmem:[%s151 + $0xf0] sm:$0xff]
      %v183 = vld [vmem:[%s151 + $0xf8] sm:$0xff]
      %s184 = scalar_lea.vmem [#allocation9], 512
      %v185 = vld [vmem:[%s184] sm:$0xff]
      %v186 = vld [vmem:[%s184 + $0x8] sm:$0xff]
      %v187 = vld [vmem:[%s184 + $0x10] sm:$0xff]
      %v188 = vld [vmem:[%s184 + $0x18] sm:$0xff]
      %v189 = vld [vmem:[%s184 + $0x20] sm:$0xff]
      %v190 = vld [vmem:[%s184 + $0x28] sm:$0xff]
      %v191 = vld [vmem:[%s184 + $0x30] sm:$0xff]
      %v192 = vld [vmem:[%s184 + $0x38] sm:$0xff]
      %v193 = vld [vmem:[%s184 + $0x40] sm:$0xff]
      %v194 = vld [vmem:[%s184 + $0x48] sm:$0xff]
      %v195 = vld [vmem:[%s184 + $0x50] sm:$0xff]
      %v196 = vld [vmem:[%s184 + $0x58] sm:$0xff]
      %v197 = vld [vmem:[%s184 + $0x60] sm:$0xff]
      %v198 = vld [vmem:[%s184 + $0x68] sm:$0xff]
      %v199 = vld [vmem:[%s184 + $0x70] sm:$0xff]
      %v200 = vld [vmem:[%s184 + $0x78] sm:$0xff]
      %v201 = vld [vmem:[%s184 + $0x80] sm:$0xff]
      %v202 = vld [vmem:[%s184 + $0x88] sm:$0xff]
      %v203 = vld [vmem:[%s184 + $0x90] sm:$0xff]
      %v204 = vld [vmem:[%s184 + $0x98] sm:$0xff]
      %v205 = vld [vmem:[%s184 + $0xa0] sm:$0xff]
      %v206 = vld [vmem:[%s184 + $0xa8] sm:$0xff]
      %v207 = vld [vmem:[%s184 + $0xb0] sm:$0xff]
      %v208 = vld [vmem:[%s184 + $0xb8] sm:$0xff]
      %v209 = vld [vmem:[%s184 + $0xc0] sm:$0xff]
      %v210 = vld [vmem:[%s184 + $0xc8] sm:$0xff]
      %v211 = vld [vmem:[%s184 + $0xd0] sm:$0xff]
      %v212 = vld [vmem:[%s184 + $0xd8] sm:$0xff]
      %v213 = vld [vmem:[%s184 + $0xe0] sm:$0xff]
      %v214 = vld [vmem:[%s184 + $0xe8] sm:$0xff]
      %v215 = vld [vmem:[%s184 + $0xf0] sm:$0xff]
      %v216 = vld [vmem:[%s184 + $0xf8] sm:$0xff]
      %v217 = vrot.slane %v149, 1
      %v218 = vrot.slane %v150, 1
      %221 = vmatprep.subr.mxu0 0.0
      %222 = vmatpush1.msra.mxu0 %v200
      %223 = vmatprep.subr.mxu0 0.0
      %224 = vmatpush1.msra.mxu0 %v199
      %225 = vmatprep.subr.mxu0 0.0
      %226 = vmatpush1.msra.mxu0 %v198
      %227 = vmatprep.subr.mxu0 0.0
      %228 = vmatpush1.msra.mxu0 %v197
      %229 = vmatprep.subr.mxu0 0.0
      %230 = vmatpush1.msra.mxu0 %v196
      %231 = vmatprep.subr.mxu0 0.0
      %232 = vmatpush1.msra.mxu0 %v195
      %233 = vmatprep.subr.mxu0 0.0
      %234 = vmatpush1.msra.mxu0 %v194
      %235 = vmatprep.subr.mxu0 0.0
      %236 = vmatpush1.msra.mxu0 %v193
      %237 = vmatprep.subr.mxu0 0.0
      %238 = vmatpush1.msra.mxu0 %v192
      %239 = vmatprep.subr.mxu0 0.0
      %240 = vmatpush1.msra.mxu0 %v191
      %241 = vmatprep.subr.mxu0 0.0
      %242 = vmatpush1.msra.mxu0 %v190
      %243 = vmatprep.subr.mxu0 0.0
      %244 = vmatpush1.msra.mxu0 %v189
      %245 = vmatprep.subr.mxu0 0.0
      %246 = vmatpush1.msra.mxu0 %v188
      %247 = vmatprep.subr.mxu0 0.0
      %248 = vmatpush1.msra.mxu0 %v187
      %249 = vmatprep.subr.mxu0 0.0
      %250 = vmatpush1.msra.mxu0 %v186
      %251 = vmatprep.subr.mxu0 0.0
      %252 = vmatpush1.msra.mxu0 %v185
      %253 = vmatprep.subr.mxu0 0.0
      %254 = vmatpush2.msra.mxu0 %v216
      %255 = vmatprep.subr.mxu0 0.0
      %256 = vmatpush2.msra.mxu0 %v215
      %257 = vmatprep.subr.mxu0 0.0
      %258 = vmatpush2.msra.mxu0 %v214
      %259 = vmatprep.subr.mxu0 0.0
      %260 = vmatpush2.msra.mxu0 %v213
      %261 = vmatprep.subr.mxu0 0.0
      %262 = vmatpush2.msra.mxu0 %v212
      %263 = vmatprep.subr.mxu0 0.0
      %264 = vmatpush2.msra.mxu0 %v211
      %265 = vmatprep.subr.mxu0 0.0
      %266 = vmatpush2.msra.mxu0 %v210
      %267 = vmatprep.subr.mxu0 0.0
      %268 = vmatpush2.msra.mxu0 %v209
      %269 = vmatprep.subr.mxu0 0.0
      %270 = vmatpush2.msra.mxu0 %v208
      %271 = vmatprep.subr.mxu0 0.0
      %272 = vmatpush2.msra.mxu0 %v207
      %273 = vmatprep.subr.mxu0 0.0
      %274 = vmatpush2.msra.mxu0 %v206
      %275 = vmatprep.subr.mxu0 0.0
      %276 = vmatpush2.msra.mxu0 %v205
      %277 = vmatprep.subr.mxu0 0.0
      %278 = vmatpush2.msra.mxu0 %v204
      %279 = vmatprep.subr.mxu0 0.0
      %280 = vmatpush2.msra.mxu0 %v203
      %281 = vmatprep.subr.mxu0 0.0
      %282 = vmatpush2.msra.mxu0 %v202
      %283 = vmatprep.subr.mxu0 0.0
      %284 = vmatpush2.msra.mxu0 %v201
      %285 = vmatprep.mubr.f32.mxu0 %v218
      %286 = vmatmul.mubr.f32.gmra.mxu0 %v217
      %v287 = vpop.f32.mrf.mxu0
      %v288 = vadd.f32 0.0, %v287
      %v289 = vpop.f32.mrf.mxu0
      %290 = vdwg.mxu0
      %291 = vmatprep.subr.mxu0 0.0
      %292 = vmatpush1.msra.mxu0 %v167
      %293 = vmatprep.subr.mxu0 0.0
      %294 = vmatpush1.msra.mxu0 %v166
      %295 = vmatprep.subr.mxu0 0.0
      %296 = vmatpush1.msra.mxu0 %v165
      %297 = vmatprep.subr.mxu0 0.0
      %298 = vmatpush1.msra.mxu0 %v164
      %299 = vmatprep.subr.mxu0 0.0
      %300 = vmatpush1.msra.mxu0 %v163
      %301 = vmatprep.subr.mxu0 0.0
      %302 = vmatpush1.msra.mxu0 %v162
      %303 = vmatprep.subr.mxu0 0.0
      %304 = vmatpush1.msra.mxu0 %v161
      %305 = vmatprep.subr.mxu0 0.0
      %306 = vmatpush1.msra.mxu0 %v160
      %307 = vmatprep.subr.mxu0 0.0
      %308 = vmatpush1.msra.mxu0 %v159
      %309 = vmatprep.subr.mxu0 0.0
      %310 = vmatpush1.msra.mxu0 %v158
      %311 = vmatprep.subr.mxu0 0.0
      %312 = vmatpush1.msra.mxu0 %v157
      %313 = vmatprep.subr.mxu0 0.0
      %314 = vmatpush1.msra.mxu0 %v156
      %315 = vmatprep.subr.mxu0 0.0
      %316 = vmatpush1.msra.mxu0 %v155
      %317 = vmatprep.subr.mxu0 0.0
      %318 = vmatpush1.msra.mxu0 %v154
      %319 = vmatprep.subr.mxu0 0.0
      %320 = vmatpush1.msra.mxu0 %v153
      %321 = vmatprep.subr.mxu0 0.0
      %322 = vmatpush1.msra.mxu0 %v152
      %323 = vmatprep.subr.mxu0 0.0
      %324 = vmatpush2.msra.mxu0 %v183
      %325 = vmatprep.subr.mxu0 0.0
      %326 = vmatpush2.msra.mxu0 %v182
      %327 = vmatprep.subr.mxu0 0.0
      %328 = vmatpush2.msra.mxu0 %v181
      %329 = vmatprep.subr.mxu0 0.0
      %330 = vmatpush2.msra.mxu0 %v180
      %331 = vmatprep.subr.mxu0 0.0
      %332 = vmatpush2.msra.mxu0 %v179
      %333 = vmatprep.subr.mxu0 0.0
      %334 = vmatpush2.msra.mxu0 %v178
      %335 = vmatprep.subr.mxu0 0.0
      %336 = vmatpush2.msra.mxu0 %v177
      %337 = vmatprep.subr.mxu0 0.0
      %338 = vmatpush2.msra.mxu0 %v176
      %339 = vmatprep.subr.mxu0 0.0
      %340 = vmatpush2.msra.mxu0 %v175
      %341 = vmatprep.subr.mxu0 0.0
      %342 = vmatpush2.msra.mxu0 %v174
      %343 = vmatprep.subr.mxu0 0.0
      %344 = vmatpush2.msra.mxu0 %v173
      %345 = vmatprep.subr.mxu0 0.0
      %346 = vmatpush2.msra.mxu0 %v172
      %347 = vmatprep.subr.mxu0 0.0
      %348 = vmatpush2.msra.mxu0 %v171
      %349 = vmatprep.subr.mxu0 0.0
      %350 = vmatpush2.msra.mxu0 %v170
      %351 = vmatprep.subr.mxu0 0.0
      %352 = vmatpush2.msra.mxu0 %v169
      %353 = vmatprep.subr.mxu0 0.0
      %354 = vmatpush2.msra.mxu0 %v168
      %355 = vmatprep.mubr.f32.mxu0 %v146
      %356 = vmatmul.mubr.f32.gmra.mxu0 %v141
      %v357 = vpop.f32.mrf.mxu0
      %v358 = vadd.f32 %v288, %v357
      %v359 = vpop.f32.mrf.mxu0
      %360 = vdwg.mxu0
      %361 = vst [vmem:[#allocation3] sm:$0x3] %v358
    $region69: #{tpu_custom_call.1} parent=1 // pred_fallthru
      _
    %v362 = vld [vmem:[#allocation2] sm:$0x3]
    %v363 = vrot.slane %v128, 4
    %v364 = vadd.f32 %v128, %v363
    %v365 = vrot.slane %v364, 2
    %v366 = vadd.f32 %v364, %v365
    %v367 = vrot.slane %v366, 1
    %v368 = vadd.f32 %v366, %v367
    %v369 = vrot.slane %v129, 4
    %v370 = vadd.f32 %v129, %v369
    %v371 = vrot.slane %v370, 2
    %v372 = vadd.f32 %v370, %v371
    %v373 = vrot.slane %v372, 1
    %v374 = vadd.f32 %v372, %v373
    %v378 = vunpack.c.l.s4 1983009808
    %v379 = vunpack.c.0.s8 %v378
    %v380 = vlaneseq
    %v381 = vshrl.u32 %v380, 7
    %v382 = vsub.s32 %v379, %v381
    %v383 = vrot.slane %v368, %v382
    %v385 = vunpack.c.l.s4 1983009808
    %v386 = vunpack.c.0.s8 %v385
    %v387 = vlaneseq
    %v388 = vshrl.u32 %v387, 7
    %v389 = vsub.s32 %v386, %v388
    %v390 = vrot.slane %v374, %v389
    %vm391 = vcmask 1044484
    %v392 = vsel %vm391, %v383, %v383
    %vm393 = vcmask 1046534
    %v394 = vsel %vm393, %v383, %v392
    %v395 = vrot.slane %v390, 7
    %vm396 = vcmask 1041409
    %v397 = vsel %vm396, %v395, %v394
    %vm398 = vcmask 1043459
    %v399 = vsel %vm398, %v395, %v397
    %vm400 = vcmask 1045509
    %v401 = vsel %vm400, %v395, %v399
    %vm402 = vcmask 1047559
    %v403 = vsel %vm402, %v395, %v401
    %v405 = vadd.f32 %v362, %v403
    %406 = vst [vmem:[#allocation2] sm:$0x3] %v405
    %v407 = vld [vmem:[#allocation2 + $0x2] sm:$0x3]
    %v408 = vrot.slane %v130, 4
    %v409 = vadd.f32 %v130, %v408
    %v410 = vrot.slane %v409, 2
    %v411 = vadd.f32 %v409, %v410
    %v412 = vrot.slane %v411, 1
    %v413 = vadd.f32 %v411, %v412
    %v414 = vrot.slane %v131, 4
    %v415 = vadd.f32 %v131, %v414
    %v416 = vrot.slane %v415, 2
    %v417 = vadd.f32 %v415, %v416
    %v418 = vrot.slane %v417, 1
    %v419 = vadd.f32 %v417, %v418
    %v423 = vunpack.c.l.s4 1983009808
    %v424 = vunpack.c.0.s8 %v423
    %v425 = vlaneseq
    %v426 = vshrl.u32 %v425, 7
    %v427 = vsub.s32 %v424, %v426
    %v428 = vrot.slane %v413, %v427
    %v430 = vunpack.c.l.s4 1983009808
    %v431 = vunpack.c.0.s8 %v430
    %v432 = vlaneseq
    %v433 = vshrl.u32 %v432, 7
    %v434 = vsub.s32 %v431, %v433
    %v435 = vrot.slane %v419, %v434
    %v436 = vsel %vm391, %v428, %v428
    %v437 = vsel %vm393, %v428, %v436
    %v438 = vrot.slane %v435, 7
    %v439 = vsel %vm396, %v438, %v437
    %v440 = vsel %vm398, %v438, %v439
    %v441 = vsel %vm400, %v438, %v440
    %v442 = vsel %vm402, %v438, %v441
    %v444 = vadd.f32 %v407, %v442
    %445 = vst [vmem:[#allocation2 + $0x2] sm:$0x3] %v444
    // Predicated region
    $region70: #{tpu_custom_call.1} parent=1 // pred_check
      %p446 = pneg %p132
    $region71: #{tpu_custom_call.1} parent=1 // pred_check_branch
      %448 = sbr.rel (%p446) target = $region73
    $region72: #{tpu_custom_call.1} parent=1 // pred_region
      %v451 = vrot.slane %v129, 7
      %v454 = vrot.slane %v131, 7
      %v455 = vsel %vm402, %v451, %v128
      %v456 = vsel %vm402, %v454, %v130
      %v457 = vld [vmem:[#allocation3] sm:$0x3]
      %s458 = scalar_lea.vmem [#allocation9], 768
      %v459 = vld [vmem:[%s458] sm:$0xff]
      %v460 = vld [vmem:[%s458 + $0x8] sm:$0xff]
      %v461 = vld [vmem:[%s458 + $0x10] sm:$0xff]
      %v462 = vld [vmem:[%s458 + $0x18] sm:$0xff]
      %v463 = vld [vmem:[%s458 + $0x20] sm:$0xff]
      %v464 = vld [vmem:[%s458 + $0x28] sm:$0xff]
      %v465 = vld [vmem:[%s458 + $0x30] sm:$0xff]
      %v466 = vld [vmem:[%s458 + $0x38] sm:$0xff]
      %v467 = vld [vmem:[%s458 + $0x40] sm:$0xff]
      %v468 = vld [vmem:[%s458 + $0x48] sm:$0xff]
      %v469 = vld [vmem:[%s458 + $0x50] sm:$0xff]
      %v470 = vld [vmem:[%s458 + $0x58] sm:$0xff]
      %v471 = vld [vmem:[%s458 + $0x60] sm:$0xff]
      %v472 = vld [vmem:[%s458 + $0x68] sm:$0xff]
      %v473 = vld [vmem:[%s458 + $0x70] sm:$0xff]
      %v474 = vld [vmem:[%s458 + $0x78] sm:$0xff]
      %v475 = vld [vmem:[%s458 + $0x80] sm:$0xff]
      %v476 = vld [vmem:[%s458 + $0x88] sm:$0xff]
      %v477 = vld [vmem:[%s458 + $0x90] sm:$0xff]
      %v478 = vld [vmem:[%s458 + $0x98] sm:$0xff]
      %v479 = vld [vmem:[%s458 + $0xa0] sm:$0xff]
      %v480 = vld [vmem:[%s458 + $0xa8] sm:$0xff]
      %v481 = vld [vmem:[%s458 + $0xb0] sm:$0xff]
      %v482 = vld [vmem:[%s458 + $0xb8] sm:$0xff]
      %v483 = vld [vmem:[%s458 + $0xc0] sm:$0xff]
      %v484 = vld [vmem:[%s458 + $0xc8] sm:$0xff]
      %v485 = vld [vmem:[%s458 + $0xd0] sm:$0xff]
      %v486 = vld [vmem:[%s458 + $0xd8] sm:$0xff]
      %v487 = vld [vmem:[%s458 + $0xe0] sm:$0xff]
      %v488 = vld [vmem:[%s458 + $0xe8] sm:$0xff]
      %v489 = vld [vmem:[%s458 + $0xf0] sm:$0xff]
      %v490 = vld [vmem:[%s458 + $0xf8] sm:$0xff]
      %vm491 = vcmask 1040384
      %v492 = vrot.slane %v128, 7
      %v493 = vrot.slane %v451, 7
      %v494 = vsel %vm491, %v492, %v493
      %v495 = vrot.slane %v130, 7
      %v496 = vrot.slane %v454, 7
      %v497 = vsel %vm491, %v495, %v496
      %500 = vmatprep.subr.mxu0 0.0
      %501 = vmatpush1.msra.mxu0 %v474
      %502 = vmatprep.subr.mxu0 0.0
      %503 = vmatpush1.msra.mxu0 %v473
      %504 = vmatprep.subr.mxu0 0.0
      %505 = vmatpush1.msra.mxu0 %v472
      %506 = vmatprep.subr.mxu0 0.0
      %507 = vmatpush1.msra.mxu0 %v471
      %508 = vmatprep.subr.mxu0 0.0
      %509 = vmatpush1.msra.mxu0 %v470
      %510 = vmatprep.subr.mxu0 0.0
      %511 = vmatpush1.msra.mxu0 %v469
      %512 = vmatprep.subr.mxu0 0.0
      %513 = vmatpush1.msra.mxu0 %v468
      %514 = vmatprep.subr.mxu0 0.0
      %515 = vmatpush1.msra.mxu0 %v467
      %516 = vmatprep.subr.mxu0 0.0
      %517 = vmatpush1.msra.mxu0 %v466
      %518 = vmatprep.subr.mxu0 0.0
      %519 = vmatpush1.msra.mxu0 %v465
      %520 = vmatprep.subr.mxu0 0.0
      %521 = vmatpush1.msra.mxu0 %v464
      %522 = vmatprep.subr.mxu0 0.0
      %523 = vmatpush1.msra.mxu0 %v463
      %524 = vmatprep.subr.mxu0 0.0
      %525 = vmatpush1.msra.mxu0 %v462
      %526 = vmatprep.subr.mxu0 0.0
      %527 = vmatpush1.msra.mxu0 %v461
      %528 = vmatprep.subr.mxu0 0.0
      %529 = vmatpush1.msra.mxu0 %v460
      %530 = vmatprep.subr.mxu0 0.0
      %531 = vmatpush1.msra.mxu0 %v459
      %532 = vmatprep.subr.mxu0 0.0
      %533 = vmatpush2.msra.mxu0 %v490
      %534 = vmatprep.subr.mxu0 0.0
      %535 = vmatpush2.msra.mxu0 %v489
      %536 = vmatprep.subr.mxu0 0.0
      %537 = vmatpush2.msra.mxu0 %v488
      %538 = vmatprep.subr.mxu0 0.0
      %539 = vmatpush2.msra.mxu0 %v487
      %540 = vmatprep.subr.mxu0 0.0
      %541 = vmatpush2.msra.mxu0 %v486
      %542 = vmatprep.subr.mxu0 0.0
      %543 = vmatpush2.msra.mxu0 %v485
      %544 = vmatprep.subr.mxu0 0.0
      %545 = vmatpush2.msra.mxu0 %v484
      %546 = vmatprep.subr.mxu0 0.0
      %547 = vmatpush2.msra.mxu0 %v483
      %548 = vmatprep.subr.mxu0 0.0
      %549 = vmatpush2.msra.mxu0 %v482
      %550 = vmatprep.subr.mxu0 0.0
      %551 = vmatpush2.msra.mxu0 %v481
      %552 = vmatprep.subr.mxu0 0.0
      %553 = vmatpush2.msra.mxu0 %v480
      %554 = vmatprep.subr.mxu0 0.0
      %555 = vmatpush2.msra.mxu0 %v479
      %556 = vmatprep.subr.mxu0 0.0
      %557 = vmatpush2.msra.mxu0 %v478
      %558 = vmatprep.subr.mxu0 0.0
      %559 = vmatpush2.msra.mxu0 %v477
      %560 = vmatprep.subr.mxu0 0.0
      %561 = vmatpush2.msra.mxu0 %v476
      %562 = vmatprep.subr.mxu0 0.0
      %563 = vmatpush2.msra.mxu0 %v475
      %564 = vmatprep.mubr.f32.mxu0 %v497
      %565 = vmatmul.mubr.f32.gmra.mxu0 %v494
      %v566 = vpop.f32.mrf.mxu0
      %v567 = vadd.f32 0.0, %v566
      %v568 = vpop.f32.mrf.mxu0
      %569 = vdwg.mxu0
      %v570 = vadd.f32 %v457, %v567
      %s571 = scalar_lea.vmem [#allocation9], 1024
      %v572 = vld [vmem:[%s571] sm:$0xff]
      %v573 = vld [vmem:[%s571 + $0x8] sm:$0xff]
      %v574 = vld [vmem:[%s571 + $0x10] sm:$0xff]
      %v575 = vld [vmem:[%s571 + $0x18] sm:$0xff]
      %v576 = vld [vmem:[%s571 + $0x20] sm:$0xff]
      %v577 = vld [vmem:[%s571 + $0x28] sm:$0xff]
      %v578 = vld [vmem:[%s571 + $0x30] sm:$0xff]
      %v579 = vld [vmem:[%s571 + $0x38] sm:$0xff]
      %v580 = vld [vmem:[%s571 + $0x40] sm:$0xff]
      %v581 = vld [vmem:[%s571 + $0x48] sm:$0xff]
      %v582 = vld [vmem:[%s571 + $0x50] sm:$0xff]
      %v583 = vld [vmem:[%s571 + $0x58] sm:$0xff]
      %v584 = vld [vmem:[%s571 + $0x60] sm:$0xff]
      %v585 = vld [vmem:[%s571 + $0x68] sm:$0xff]
      %v586 = vld [vmem:[%s571 + $0x70] sm:$0xff]
      %v587 = vld [vmem:[%s571 + $0x78] sm:$0xff]
      %v588 = vld [vmem:[%s571 + $0x80] sm:$0xff]
      %v589 = vld [vmem:[%s571 + $0x88] sm:$0xff]
      %v590 = vld [vmem:[%s571 + $0x90] sm:$0xff]
      %v591 = vld [vmem:[%s571 + $0x98] sm:$0xff]
      %v592 = vld [vmem:[%s571 + $0xa0] sm:$0xff]
      %v593 = vld [vmem:[%s571 + $0xa8] sm:$0xff]
      %v594 = vld [vmem:[%s571 + $0xb0] sm:$0xff]
      %v595 = vld [vmem:[%s571 + $0xb8] sm:$0xff]
      %v596 = vld [vmem:[%s571 + $0xc0] sm:$0xff]
      %v597 = vld [vmem:[%s571 + $0xc8] sm:$0xff]
      %v598 = vld [vmem:[%s571 + $0xd0] sm:$0xff]
      %v599 = vld [vmem:[%s571 + $0xd8] sm:$0xff]
      %v600 = vld [vmem:[%s571 + $0xe0] sm:$0xff]
      %v601 = vld [vmem:[%s571 + $0xe8] sm:$0xff]
      %v602 = vld [vmem:[%s571 + $0xf0] sm:$0xff]
      %v603 = vld [vmem:[%s571 + $0xf8] sm:$0xff]
      %v604 = vrot.slane %v455, 6
      %v605 = vrot.slane %v456, 6
      %608 = vmatprep.subr.mxu0 0.0
      %609 = vmatpush1.msra.mxu0 %v587
      %610 = vmatprep.subr.mxu0 0.0
      %611 = vmatpush1.msra.mxu0 %v586
      %612 = vmatprep.subr.mxu0 0.0
      %613 = vmatpush1.msra.mxu0 %v585
      %614 = vmatprep.subr.mxu0 0.0
      %615 = vmatpush1.msra.mxu0 %v584
      %616 = vmatprep.subr.mxu0 0.0
      %617 = vmatpush1.msra.mxu0 %v583
      %618 = vmatprep.subr.mxu0 0.0
      %619 = vmatpush1.msra.mxu0 %v582
      %620 = vmatprep.subr.mxu0 0.0
      %621 = vmatpush1.msra.mxu0 %v581
      %622 = vmatprep.subr.mxu0 0.0
      %623 = vmatpush1.msra.mxu0 %v580
      %624 = vmatprep.subr.mxu0 0.0
      %625 = vmatpush1.msra.mxu0 %v579
      %626 = vmatprep.subr.mxu0 0.0
      %627 = vmatpush1.msra.mxu0 %v578
      %628 = vmatprep.subr.mxu0 0.0
      %629 = vmatpush1.msra.mxu0 %v577
      %630 = vmatprep.subr.mxu0 0.0
      %631 = vmatpush1.msra.mxu0 %v576
      %632 = vmatprep.subr.mxu0 0.0
      %633 = vmatpush1.msra.mxu0 %v575
      %634 = vmatprep.subr.mxu0 0.0
      %635 = vmatpush1.msra.mxu0 %v574
      %636 = vmatprep.subr.mxu0 0.0
      %637 = vmatpush1.msra.mxu0 %v573
      %638 = vmatprep.subr.mxu0 0.0
      %639 = vmatpush1.msra.mxu0 %v572
      %640 = vmatprep.subr.mxu0 0.0
      %641 = vmatpush2.msra.mxu0 %v603
      %642 = vmatprep.subr.mxu0 0.0
      %643 = vmatpush2.msra.mxu0 %v602
      %644 = vmatprep.subr.mxu0 0.0
      %645 = vmatpush2.msra.mxu0 %v601
      %646 = vmatprep.subr.mxu0 0.0
      %647 = vmatpush2.msra.mxu0 %v600
      %648 = vmatprep.subr.mxu0 0.0
      %649 = vmatpush2.msra.mxu0 %v599
      %650 = vmatprep.subr.mxu0 0.0
      %651 = vmatpush2.msra.mxu0 %v598
      %652 = vmatprep.subr.mxu0 0.0
      %653 = vmatpush2.msra.mxu0 %v597
      %654 = vmatprep.subr.mxu0 0.0
      %655 = vmatpush2.msra.mxu0 %v596
      %656 = vmatprep.subr.mxu0 0.0
      %657 = vmatpush2.msra.mxu0 %v595
      %658 = vmatprep.subr.mxu0 0.0
      %659 = vmatpush2.msra.mxu0 %v594
      %660 = vmatprep.subr.mxu0 0.0
      %661 = vmatpush2.msra.mxu0 %v593
      %662 = vmatprep.subr.mxu0 0.0
      %663 = vmatpush2.msra.mxu0 %v592
      %664 = vmatprep.subr.mxu0 0.0
      %665 = vmatpush2.msra.mxu0 %v591
      %666 = vmatprep.subr.mxu0 0.0
      %667 = vmatpush2.msra.mxu0 %v590
      %668 = vmatprep.subr.mxu0 0.0
      %669 = vmatpush2.msra.mxu0 %v589
      %670 = vmatprep.subr.mxu0 0.0
      %671 = vmatpush2.msra.mxu0 %v588
      %672 = vmatprep.mubr.f32.mxu0 %v605
      %673 = vmatmul.mubr.f32.gmra.mxu0 %v604
      %v674 = vpop.f32.mrf.mxu0
      %v675 = vadd.f32 0.0, %v674
      %v676 = vpop.f32.mrf.mxu0
      %677 = vdwg.mxu0
      %v678 = vadd.f32 %v570, %v675
      %v679 = vld [vmem:[#allocation2] sm:$0xf]
      %v680 = vld [vmem:[#allocation9] sm:$0xff]
      %v681 = vld [vmem:[#allocation9 + $0x8] sm:$0xff]
      %v682 = vld [vmem:[#allocation9 + $0x10] sm:$0xff]
      %v683 = vld [vmem:[#allocation9 + $0x18] sm:$0xff]
      %v684 = vld [vmem:[#allocation9 + $0x20] sm:$0xff]
      %v685 = vld [vmem:[#allocation9 + $0x28] sm:$0xff]
      %v686 = vld [vmem:[#allocation9 + $0x30] sm:$0xff]
      %v687 = vld [vmem:[#allocation9 + $0x38] sm:$0xff]
      %v688 = vld [vmem:[#allocation9 + $0x40] sm:$0xff]
      %v689 = vld [vmem:[#allocation9 + $0x48] sm:$0xff]
      %v690 = vld [vmem:[#allocation9 + $0x50] sm:$0xff]
      %v691 = vld [vmem:[#allocation9 + $0x58] sm:$0xff]
      %v692 = vld [vmem:[#allocation9 + $0x60] sm:$0xff]
      %v693 = vld [vmem:[#allocation9 + $0x68] sm:$0xff]
      %v694 = vld [vmem:[#allocation9 + $0x70] sm:$0xff]
      %v695 = vld [vmem:[#allocation9 + $0x78] sm:$0xff]
      %v696 = vld [vmem:[#allocation9 + $0x80] sm:$0xff]
      %v697 = vld [vmem:[#allocation9 + $0x88] sm:$0xff]
      %v698 = vld [vmem:[#allocation9 + $0x90] sm:$0xff]
      %v699 = vld [vmem:[#allocation9 + $0x98] sm:$0xff]
      %v700 = vld [vmem:[#allocation9 + $0xa0] sm:$0xff]
      %v701 = vld [vmem:[#allocation9 + $0xa8] sm:$0xff]
      %v702 = vld [vmem:[#allocation9 + $0xb0] sm:$0xff]
      %v703 = vld [vmem:[#allocation9 + $0xb8] sm:$0xff]
      %v704 = vld [vmem:[#allocation9 + $0xc0] sm:$0xff]
      %v705 = vld [vmem:[#allocation9 + $0xc8] sm:$0xff]
      %v706 = vld [vmem:[#allocation9 + $0xd0] sm:$0xff]
      %v707 = vld [vmem:[#allocation9 + $0xd8] sm:$0xff]
      %v708 = vld [vmem:[#allocation9 + $0xe0] sm:$0xff]
      %v709 = vld [vmem:[#allocation9 + $0xe8] sm:$0xff]
      %v710 = vld [vmem:[#allocation9 + $0xf0] sm:$0xff]
      %v711 = vld [vmem:[#allocation9 + $0xf8] sm:$0xff]
      %v714 = vunpack.c.l.s4 1983009808
      %v715 = vunpack.c.0.s8 %v714
      %v716 = vlaneseq
      %v717 = vshrl.u32 %v716, 7
      %v718 = vsub.s32 %v715, %v717
      %v719 = vrot.slane %v679, %v718
      %v720 = vcombine.high %v719, %v719
      %723 = vmatprep.subr.mxu0 0.0
      %724 = vmatpush1.msra.mxu0 %v695
      %725 = vmatprep.subr.mxu0 0.0
      %726 = vmatpush1.msra.mxu0 %v694
      %727 = vmatprep.subr.mxu0 0.0
      %728 = vmatpush1.msra.mxu0 %v693
      %729 = vmatprep.subr.mxu0 0.0
      %730 = vmatpush1.msra.mxu0 %v692
      %731 = vmatprep.subr.mxu0 0.0
      %732 = vmatpush1.msra.mxu0 %v691
      %733 = vmatprep.subr.mxu0 0.0
      %734 = vmatpush1.msra.mxu0 %v690
      %735 = vmatprep.subr.mxu0 0.0
      %736 = vmatpush1.msra.mxu0 %v689
      %737 = vmatprep.subr.mxu0 0.0
      %738 = vmatpush1.msra.mxu0 %v688
      %739 = vmatprep.subr.mxu0 0.0
      %740 = vmatpush1.msra.mxu0 %v687
      %741 = vmatprep.subr.mxu0 0.0
      %742 = vmatpush1.msra.mxu0 %v686
      %743 = vmatprep.subr.mxu0 0.0
      %744 = vmatpush1.msra.mxu0 %v685
      %745 = vmatprep.subr.mxu0 0.0
      %746 = vmatpush1.msra.mxu0 %v684
      %747 = vmatprep.subr.mxu0 0.0
      %748 = vmatpush1.msra.mxu0 %v683
      %749 = vmatprep.subr.mxu0 0.0
      %750 = vmatpush1.msra.mxu0 %v682
      %751 = vmatprep.subr.mxu0 0.0
      %752 = vmatpush1.msra.mxu0 %v681
      %753 = vmatprep.subr.mxu0 0.0
      %754 = vmatpush1.msra.mxu0 %v680
      %755 = vmatprep.subr.mxu0 0.0
      %756 = vmatpush2.msra.mxu0 %v711
      %757 = vmatprep.subr.mxu0 0.0
      %758 = vmatpush2.msra.mxu0 %v710
      %759 = vmatprep.subr.mxu0 0.0
      %760 = vmatpush2.msra.mxu0 %v709
      %761 = vmatprep.subr.mxu0 0.0
      %762 = vmatpush2.msra.mxu0 %v708
      %763 = vmatprep.subr.mxu0 0.0
      %764 = vmatpush2.msra.mxu0 %v707
      %765 = vmatprep.subr.mxu0 0.0
      %766 = vmatpush2.msra.mxu0 %v706
      %767 = vmatprep.subr.mxu0 0.0
      %768 = vmatpush2.msra.mxu0 %v705
      %769 = vmatprep.subr.mxu0 0.0
      %770 = vmatpush2.msra.mxu0 %v704
      %771 = vmatprep.subr.mxu0 0.0
      %772 = vmatpush2.msra.mxu0 %v703
      %773 = vmatprep.subr.mxu0 0.0
      %774 = vmatpush2.msra.mxu0 %v702
      %775 = vmatprep.subr.mxu0 0.0
      %776 = vmatpush2.msra.mxu0 %v701
      %777 = vmatprep.subr.mxu0 0.0
      %778 = vmatpush2.msra.mxu0 %v700
      %779 = vmatprep.subr.mxu0 0.0
      %780 = vmatpush2.msra.mxu0 %v699
      %781 = vmatprep.subr.mxu0 0.0
      %782 = vmatpush2.msra.mxu0 %v698
      %783 = vmatprep.subr.mxu0 0.0
      %784 = vmatpush2.msra.mxu0 %v697
      %785 = vmatprep.subr.mxu0 0.0
      %786 = vmatpush2.msra.mxu0 %v696
      %787 = vmatprep.mubr.f32.mxu0 %v720
      %788 = vmatmul.mubr.f32.gmra.mxu0 %v719
      %v789 = vpop.f32.mrf.mxu0
      %v790 = vadd.f32 0.0, %v789
      %v791 = vpop.f32.mrf.mxu0
      %792 = vdwg.mxu0
      %v793 = vsub.f32 %v790, %v678
      %v794 = vld [vmem:[#allocation10] sm:$0xff]
      %v795 = vld [vmem:[#allocation10 + $0x8] sm:$0xff]
      %v796 = vld [vmem:[#allocation10 + $0x10] sm:$0xff]
      %v797 = vld [vmem:[#allocation10 + $0x18] sm:$0xff]
      %v798 = vld [vmem:[#allocation10 + $0x20] sm:$0xff]
      %v799 = vld [vmem:[#allocation10 + $0x28] sm:$0xff]
      %v800 = vld [vmem:[#allocation10 + $0x30] sm:$0xff]
      %v801 = vld [vmem:[#allocation10 + $0x38] sm:$0xff]
      %v802 = vld [vmem:[#allocation10 + $0x40] sm:$0xff]
      %v803 = vld [vmem:[#allocation10 + $0x48] sm:$0xff]
      %v804 = vld [vmem:[#allocation10 + $0x50] sm:$0xff]
      %v805 = vld [vmem:[#allocation10 + $0x58] sm:$0xff]
      %v806 = vld [vmem:[#allocation10 + $0x60] sm:$0xff]
      %v807 = vld [vmem:[#allocation10 + $0x68] sm:$0xff]
      %v808 = vld [vmem:[#allocation10 + $0x70] sm:$0xff]
      %v809 = vld [vmem:[#allocation10 + $0x78] sm:$0xff]
      %v810 = vld [vmem:[#allocation10 + $0x80] sm:$0xff]
      %v811 = vld [vmem:[#allocation10 + $0x88] sm:$0xff]
      %v812 = vld [vmem:[#allocation10 + $0x90] sm:$0xff]
      %v813 = vld [vmem:[#allocation10 + $0x98] sm:$0xff]
      %v814 = vld [vmem:[#allocation10 + $0xa0] sm:$0xff]
      %v815 = vld [vmem:[#allocation10 + $0xa8] sm:$0xff]
      %v816 = vld [vmem:[#allocation10 + $0xb0] sm:$0xff]
      %v817 = vld [vmem:[#allocation10 + $0xb8] sm:$0xff]
      %v818 = vld [vmem:[#allocation10 + $0xc0] sm:$0xff]
      %v819 = vld [vmem:[#allocation10 + $0xc8] sm:$0xff]
      %v820 = vld [vmem:[#allocation10 + $0xd0] sm:$0xff]
      %v821 = vld [vmem:[#allocation10 + $0xd8] sm:$0xff]
      %v822 = vld [vmem:[#allocation10 + $0xe0] sm:$0xff]
      %v823 = vld [vmem:[#allocation10 + $0xe8] sm:$0xff]
      %v824 = vld [vmem:[#allocation10 + $0xf0] sm:$0xff]
      %v825 = vld [vmem:[#allocation10 + $0xf8] sm:$0xff]
      %v826 = vld [vmem:[#allocation12] sm:$0xff]
      %v827 = vld [vmem:[#allocation12 + $0x8] sm:$0xff]
      %v828 = vld [vmem:[#allocation12 + $0x10] sm:$0xff]
      %v829 = vld [vmem:[#allocation12 + $0x18] sm:$0xff]
      %v830 = vld [vmem:[#allocation12 + $0x20] sm:$0xff]
      %v831 = vld [vmem:[#allocation12 + $0x28] sm:$0xff]
      %v832 = vld [vmem:[#allocation12 + $0x30] sm:$0xff]
      %v833 = vld [vmem:[#allocation12 + $0x38] sm:$0xff]
      %v834 = vld [vmem:[#allocation12 + $0x40] sm:$0xff]
      %v835 = vld [vmem:[#allocation12 + $0x48] sm:$0xff]
      %v836 = vld [vmem:[#allocation12 + $0x50] sm:$0xff]
      %v837 = vld [vmem:[#allocation12 + $0x58] sm:$0xff]
      %v838 = vld [vmem:[#allocation12 + $0x60] sm:$0xff]
      %v839 = vld [vmem:[#allocation12 + $0x68] sm:$0xff]
      %v840 = vld [vmem:[#allocation12 + $0x70] sm:$0xff]
      %v841 = vld [vmem:[#allocation12 + $0x78] sm:$0xff]
      %v842 = vld [vmem:[#allocation12 + $0x80] sm:$0xff]
      %v843 = vld [vmem:[#allocation12 + $0x88] sm:$0xff]
      %v844 = vld [vmem:[#allocation12 + $0x90] sm:$0xff]
      %v845 = vld [vmem:[#allocation12 + $0x98] sm:$0xff]
      %v846 = vld [vmem:[#allocation12 + $0xa0] sm:$0xff]
      %v847 = vld [vmem:[#allocation12 + $0xa8] sm:$0xff]
      %v848 = vld [vmem:[#allocation12 + $0xb0] sm:$0xff]
      %v849 = vld [vmem:[#allocation12 + $0xb8] sm:$0xff]
      %v850 = vld [vmem:[#allocation12 + $0xc0] sm:$0xff]
      %v851 = vld [vmem:[#allocation12 + $0xc8] sm:$0xff]
      %v852 = vld [vmem:[#allocation12 + $0xd0] sm:$0xff]
      %v853 = vld [vmem:[#allocation12 + $0xd8] sm:$0xff]
      %v854 = vld [vmem:[#allocation12 + $0xe0] sm:$0xff]
      %v855 = vld [vmem:[#allocation12 + $0xe8] sm:$0xff]
      %v856 = vld [vmem:[#allocation12 + $0xf0] sm:$0xff]
      %v857 = vld [vmem:[#allocation12 + $0xf8] sm:$0xff]
      %v858 = vld [vmem:[#allocation12 + $0x100] sm:$0xff]
      %v859 = vld [vmem:[#allocation12 + $0x108] sm:$0xff]
      %v860 = vld [vmem:[#allocation12 + $0x110] sm:$0xff]
      %v861 = vld [vmem:[#allocation12 + $0x118] sm:$0xff]
      %v862 = vld [vmem:[#allocation12 + $0x120] sm:$0xff]
      %v863 = vld [vmem:[#allocation12 + $0x128] sm:$0xff]
      %v864 = vld [vmem:[#allocation12 + $0x130] sm:$0xff]
      %v865 = vld [vmem:[#allocation12 + $0x138] sm:$0xff]
      %v866 = vld [vmem:[#allocation12 + $0x140] sm:$0xff]
      %v867 = vld [vmem:[#allocation12 + $0x148] sm:$0xff]
      %v868 = vld [vmem:[#allocation12 + $0x150] sm:$0xff]
      %v869 = vld [vmem:[#allocation12 + $0x158] sm:$0xff]
      %v870 = vld [vmem:[#allocation12 + $0x160] sm:$0xff]
      %v871 = vld [vmem:[#allocation12 + $0x168] sm:$0xff]
      %v872 = vld [vmem:[#allocation12 + $0x170] sm:$0xff]
      %v873 = vld [vmem:[#allocation12 + $0x178] sm:$0xff]
      %v874 = vld [vmem:[#allocation12 + $0x180] sm:$0xff]
      %v875 = vld [vmem:[#allocation12 + $0x188] sm:$0xff]
      %v876 = vld [vmem:[#allocation12 + $0x190] sm:$0xff]
      %v877 = vld [vmem:[#allocation12 + $0x198] sm:$0xff]
      %v878 = vld [vmem:[#allocation12 + $0x1a0] sm:$0xff]
      %v879 = vld [vmem:[#allocation12 + $0x1a8] sm:$0xff]
      %v880 = vld [vmem:[#allocation12 + $0x1b0] sm:$0xff]
      %v881 = vld [vmem:[#allocation12 + $0x1b8] sm:$0xff]
      %v882 = vld [vmem:[#allocation12 + $0x1c0] sm:$0xff]
      %v883 = vld [vmem:[#allocation12 + $0x1c8] sm:$0xff]
      %v884 = vld [vmem:[#allocation12 + $0x1d0] sm:$0xff]
      %v885 = vld [vmem:[#allocation12 + $0x1d8] sm:$0xff]
      %v886 = vld [vmem:[#allocation12 + $0x1e0] sm:$0xff]
      %v887 = vld [vmem:[#allocation12 + $0x1e8] sm:$0xff]
      %v888 = vld [vmem:[#allocation12 + $0x1f0] sm:$0xff]
      %v889 = vld [vmem:[#allocation12 + $0x1f8] sm:$0xff]
      %890 = vmatprep.subr.mxu0 %v857
      %891 = vmatpush1.msra.mxu0 %v856
      %892 = vmatprep.subr.mxu0 %v855
      %893 = vmatpush1.msra.mxu0 %v854
      %894 = vmatprep.subr.mxu0 %v853
      %895 = vmatpush1.msra.mxu0 %v852
      %896 = vmatprep.subr.mxu0 %v851
      %897 = vmatpush1.msra.mxu0 %v850
      %898 = vmatprep.subr.mxu0 %v849
      %899 = vmatpush1.msra.mxu0 %v848
      %900 = vmatprep.subr.mxu0 %v847
      %901 = vmatpush1.msra.mxu0 %v846
      %902 = vmatprep.subr.mxu0 %v845
      %903 = vmatpush1.msra.mxu0 %v844
      %904 = vmatprep.subr.mxu0 %v843
      %905 = vmatpush1.msra.mxu0 %v842
      %906 = vmatprep.subr.mxu0 %v841
      %907 = vmatpush1.msra.mxu0 %v840
      %908 = vmatprep.subr.mxu0 %v839
      %909 = vmatpush1.msra.mxu0 %v838
      %910 = vmatprep.subr.mxu0 %v837
      %911 = vmatpush1.msra.mxu0 %v836
      %912 = vmatprep.subr.mxu0 %v835
      %913 = vmatpush1.msra.mxu0 %v834
      %914 = vmatprep.subr.mxu0 %v833
      %915 = vmatpush1.msra.mxu0 %v832
      %916 = vmatprep.subr.mxu0 %v831
      %917 = vmatpush1.msra.mxu0 %v830
      %918 = vmatprep.subr.mxu0 %v829
      %919 = vmatpush1.msra.mxu0 %v828
      %920 = vmatprep.subr.mxu0 %v827
      %921 = vmatpush1.msra.mxu0 %v826
      %922 = vmatprep.subr.mxu0 %v889
      %923 = vmatpush2.msra.mxu0 %v888
      %924 = vmatprep.subr.mxu0 %v887
      %925 = vmatpush2.msra.mxu0 %v886
      %926 = vmatprep.subr.mxu0 %v885
      %927 = vmatpush2.msra.mxu0 %v884
      %928 = vmatprep.subr.mxu0 %v883
      %929 = vmatpush2.msra.mxu0 %v882
      %930 = vmatprep.subr.mxu0 %v881
      %931 = vmatpush2.msra.mxu0 %v880
      %932 = vmatprep.subr.mxu0 %v879
      %933 = vmatpush2.msra.mxu0 %v878
      %934 = vmatprep.subr.mxu0 %v877
      %935 = vmatpush2.msra.mxu0 %v876
      %936 = vmatprep.subr.mxu0 %v875
      %937 = vmatpush2.msra.mxu0 %v874
      %938 = vmatprep.subr.mxu0 %v873
      %939 = vmatpush2.msra.mxu0 %v872
      %940 = vmatprep.subr.mxu0 %v871
      %941 = vmatpush2.msra.mxu0 %v870
      %942 = vmatprep.subr.mxu0 %v869
      %943 = vmatpush2.msra.mxu0 %v868
      %944 = vmatprep.subr.mxu0 %v867
      %945 = vmatpush2.msra.mxu0 %v866
      %946 = vmatprep.subr.mxu0 %v865
      %947 = vmatpush2.msra.mxu0 %v864
      %948 = vmatprep.subr.mxu0 %v863
      %949 = vmatpush2.msra.mxu0 %v862
      %950 = vmatprep.subr.mxu0 %v861
      %951 = vmatpush2.msra.mxu0 %v860
      %952 = vmatprep.subr.mxu0 %v859
      %953 = vmatpush2.msra.mxu0 %v858
      %954 = vmatprep.mubr.f32.mxu0 %v720
      %955 = vmatmul.mubr.f32.gmra.mxu0 %v719
      %v956 = vpop.f32.mrf.mxu0
      %v957 = vadd.f32 0.0, %v956
      %v958 = vpop.f32.mrf.mxu0
      %v959 = vadd.f32 0.0, %v958
      %960 = vdwg.mxu0
      %961 = vmatprep.subr.mxu0 %v825
      %962 = vmatpush1.msra.mxu0 %v824
      %963 = vmatprep.subr.mxu0 %v823
      %964 = vmatpush1.msra.mxu0 %v822
      %965 = vmatprep.subr.mxu0 %v821
      %966 = vmatpush1.msra.mxu0 %v820
      %967 = vmatprep.subr.mxu0 %v819
      %968 = vmatpush1.msra.mxu0 %v818
      %969 = vmatprep.subr.mxu0 %v817
      %970 = vmatpush1.msra.mxu0 %v816
      %971 = vmatprep.subr.mxu0 %v815
      %972 = vmatpush1.msra.mxu0 %v814
      %973 = vmatprep.subr.mxu0 %v813
      %974 = vmatpush1.msra.mxu0 %v812
      %975 = vmatprep.subr.mxu0 %v811
      %976 = vmatpush1.msra.mxu0 %v810
      %977 = vmatprep.subr.mxu0 %v809
      %978 = vmatpush1.msra.mxu0 %v808
      %979 = vmatprep.subr.mxu0 %v807
      %980 = vmatpush1.msra.mxu0 %v806
      %981 = vmatprep.subr.mxu0 %v805
      %982 = vmatpush1.msra.mxu0 %v804
      %983 = vmatprep.subr.mxu0 %v803
      %984 = vmatpush1.msra.mxu0 %v802
      %985 = vmatprep.subr.mxu0 %v801
      %986 = vmatpush1.msra.mxu0 %v800
      %987 = vmatprep.subr.mxu0 %v799
      %988 = vmatpush1.msra.mxu0 %v798
      %989 = vmatprep.subr.mxu0 %v797
      %990 = vmatpush1.msra.mxu0 %v796
      %991 = vmatprep.subr.mxu0 %v795
      %992 = vmatpush1.msra.mxu0 %v794
      %993 = vmatprep.subr.mxu0 0.0
      %994 = vmatpush2.msra.mxu0 0.0
      %995 = vmatprep.subr.mxu0 0.0
      %996 = vmatpush2.msra.mxu0 0.0
      %997 = vmatprep.subr.mxu0 0.0
      %998 = vmatpush2.msra.mxu0 0.0
      %999 = vmatprep.subr.mxu0 0.0
      %1000 = vmatpush2.msra.mxu0 0.0
      %1001 = vmatprep.subr.mxu0 0.0
      %1002 = vmatpush2.msra.mxu0 0.0
      %1003 = vmatprep.subr.mxu0 0.0
      %1004 = vmatpush2.msra.mxu0 0.0
      %1005 = vmatprep.subr.mxu0 0.0
      %1006 = vmatpush2.msra.mxu0 0.0
      %1007 = vmatprep.subr.mxu0 0.0
      %1008 = vmatpush2.msra.mxu0 0.0
      %1009 = vmatprep.subr.mxu0 0.0
      %1010 = vmatpush2.msra.mxu0 0.0
      %1011 = vmatprep.subr.mxu0 0.0
      %1012 = vmatpush2.msra.mxu0 0.0
      %1013 = vmatprep.subr.mxu0 0.0
      %1014 = vmatpush2.msra.mxu0 0.0
      %1015 = vmatprep.subr.mxu0 0.0
      %1016 = vmatpush2.msra.mxu0 0.0
      %1017 = vmatprep.subr.mxu0 0.0
      %1018 = vmatpush2.msra.mxu0 0.0
      %1019 = vmatprep.subr.mxu0 0.0
      %1020 = vmatpush2.msra.mxu0 0.0
      %1021 = vmatprep.subr.mxu0 0.0
      %1022 = vmatpush2.msra.mxu0 0.0
      %1023 = vmatprep.subr.mxu0 0.0
      %1024 = vmatpush2.msra.mxu0 0.0
      %1025 = vmatprep.mubr.f32.mxu0 0.0
      %1026 = vmatmul.mubr.f32.gmra.mxu0 %v793
      %v1027 = vpop.f32.mrf.mxu0
      %v1028 = vadd.f32 %v957, %v1027
      %v1029 = vpop.f32.mrf.mxu0
      %v1030 = vadd.f32 %v959, %v1029
      %1031 = vdwg.mxu0
      %v1032 = vld [vmem:[%s7] sm:$0x3]
      %v1034 = vlaneseq
      %v1035 = vshrl.u32 %v1034, 7
      %v1036 = vsub.s32 0, %v1035
      %v1037 = vrot.slane %v1032, %v1036
      %v1038 = vlaneseq
      %v1039 = vshrl.u32 %v1038, 7
      %v1040 = vsub.s32 1, %v1039
      %v1041 = vrot.slane %v1032, %v1040
      %v1044 = vadd.f32 %v1028, %v1037
      %v1045 = vadd.f32 %v1030, %v1041
      %v1046 = vmax.f32 %v1044, 0.0
      %v1047 = vmax.f32 %v1045, 0.0
      %v1048 = vld [vmem:[#allocation13] sm:$0xff]
      %v1049 = vld [vmem:[#allocation13 + $0x8] sm:$0xff]
      %v1050 = vld [vmem:[#allocation13 + $0x10] sm:$0xff]
      %v1051 = vld [vmem:[#allocation13 + $0x18] sm:$0xff]
      %v1052 = vld [vmem:[#allocation13 + $0x20] sm:$0xff]
      %v1053 = vld [vmem:[#allocation13 + $0x28] sm:$0xff]
      %v1054 = vld [vmem:[#allocation13 + $0x30] sm:$0xff]
      %v1055 = vld [vmem:[#allocation13 + $0x38] sm:$0xff]
      %v1056 = vld [vmem:[#allocation13 + $0x40] sm:$0xff]
      %v1057 = vld [vmem:[#allocation13 + $0x48] sm:$0xff]
      %v1058 = vld [vmem:[#allocation13 + $0x50] sm:$0xff]
      %v1059 = vld [vmem:[#allocation13 + $0x58] sm:$0xff]
      %v1060 = vld [vmem:[#allocation13 + $0x60] sm:$0xff]
      %v1061 = vld [vmem:[#allocation13 + $0x68] sm:$0xff]
      %v1062 = vld [vmem:[#allocation13 + $0x70] sm:$0xff]
      %v1063 = vld [vmem:[#allocation13 + $0x78] sm:$0xff]
      %v1064 = vld [vmem:[#allocation13 + $0x80] sm:$0xff]
      %v1065 = vld [vmem:[#allocation13 + $0x88] sm:$0xff]
      %v1066 = vld [vmem:[#allocation13 + $0x90] sm:$0xff]
      %v1067 = vld [vmem:[#allocation13 + $0x98] sm:$0xff]
      %v1068 = vld [vmem:[#allocation13 + $0xa0] sm:$0xff]
      %v1069 = vld [vmem:[#allocation13 + $0xa8] sm:$0xff]
      %v1070 = vld [vmem:[#allocation13 + $0xb0] sm:$0xff]
      %v1071 = vld [vmem:[#allocation13 + $0xb8] sm:$0xff]
      %v1072 = vld [vmem:[#allocation13 + $0xc0] sm:$0xff]
      %v1073 = vld [vmem:[#allocation13 + $0xc8] sm:$0xff]
      %v1074 = vld [vmem:[#allocation13 + $0xd0] sm:$0xff]
      %v1075 = vld [vmem:[#allocation13 + $0xd8] sm:$0xff]
      %v1076 = vld [vmem:[#allocation13 + $0xe0] sm:$0xff]
      %v1077 = vld [vmem:[#allocation13 + $0xe8] sm:$0xff]
      %v1078 = vld [vmem:[#allocation13 + $0xf0] sm:$0xff]
      %v1079 = vld [vmem:[#allocation13 + $0xf8] sm:$0xff]
      %v1080 = vld [vmem:[#allocation15] sm:$0xff]
      %v1081 = vld [vmem:[#allocation15 + $0x8] sm:$0xff]
      %v1082 = vld [vmem:[#allocation15 + $0x10] sm:$0xff]
      %v1083 = vld [vmem:[#allocation15 + $0x18] sm:$0xff]
      %v1084 = vld [vmem:[#allocation15 + $0x20] sm:$0xff]
      %v1085 = vld [vmem:[#allocation15 + $0x28] sm:$0xff]
      %v1086 = vld [vmem:[#allocation15 + $0x30] sm:$0xff]
      %v1087 = vld [vmem:[#allocation15 + $0x38] sm:$0xff]
      %v1088 = vld [vmem:[#allocation15 + $0x40] sm:$0xff]
      %v1089 = vld [vmem:[#allocation15 + $0x48] sm:$0xff]
      %v1090 = vld [vmem:[#allocation15 + $0x50] sm:$0xff]
      %v1091 = vld [vmem:[#allocation15 + $0x58] sm:$0xff]
      %v1092 = vld [vmem:[#allocation15 + $0x60] sm:$0xff]
      %v1093 = vld [vmem:[#allocation15 + $0x68] sm:$0xff]
      %v1094 = vld [vmem:[#allocation15 + $0x70] sm:$0xff]
      %v1095 = vld [vmem:[#allocation15 + $0x78] sm:$0xff]
      %v1096 = vld [vmem:[#allocation15 + $0x80] sm:$0xff]
      %v1097 = vld [vmem:[#allocation15 + $0x88] sm:$0xff]
      %v1098 = vld [vmem:[#allocation15 + $0x90] sm:$0xff]
      %v1099 = vld [vmem:[#allocation15 + $0x98] sm:$0xff]
      %v1100 = vld [vmem:[#allocation15 + $0xa0] sm:$0xff]
      %v1101 = vld [vmem:[#allocation15 + $0xa8] sm:$0xff]
      %v1102 = vld [vmem:[#allocation15 + $0xb0] sm:$0xff]
      %v1103 = vld [vmem:[#allocation15 + $0xb8] sm:$0xff]
      %v1104 = vld [vmem:[#allocation15 + $0xc0] sm:$0xff]
      %v1105 = vld [vmem:[#allocation15 + $0xc8] sm:$0xff]
      %v1106 = vld [vmem:[#allocation15 + $0xd0] sm:$0xff]
      %v1107 = vld [vmem:[#allocation15 + $0xd8] sm:$0xff]
      %v1108 = vld [vmem:[#allocation15 + $0xe0] sm:$0xff]
      %v1109 = vld [vmem:[#allocation15 + $0xe8] sm:$0xff]
      %v1110 = vld [vmem:[#allocation15 + $0xf0] sm:$0xff]
      %v1111 = vld [vmem:[#allocation15 + $0xf8] sm:$0xff]
      %1112 = vmatprep.subr.mxu0 0.0
      %1113 = vmatpush1.msra.mxu0 %v1095
      %1114 = vmatprep.subr.mxu0 0.0
      %1115 = vmatpush1.msra.mxu0 %v1094
      %1116 = vmatprep.subr.mxu0 0.0
      %1117 = vmatpush1.msra.mxu0 %v1093
      %1118 = vmatprep.subr.mxu0 0.0
      %1119 = vmatpush1.msra.mxu0 %v1092
      %1120 = vmatprep.subr.mxu0 0.0
      %1121 = vmatpush1.msra.mxu0 %v1091
      %1122 = vmatprep.subr.mxu0 0.0
      %1123 = vmatpush1.msra.mxu0 %v1090
      %1124 = vmatprep.subr.mxu0 0.0
      %1125 = vmatpush1.msra.mxu0 %v1089
      %1126 = vmatprep.subr.mxu0 0.0
      %1127 = vmatpush1.msra.mxu0 %v1088
      %1128 = vmatprep.subr.mxu0 0.0
      %1129 = vmatpush1.msra.mxu0 %v1087
      %1130 = vmatprep.subr.mxu0 0.0
      %1131 = vmatpush1.msra.mxu0 %v1086
      %1132 = vmatprep.subr.mxu0 0.0
      %1133 = vmatpush1.msra.mxu0 %v1085
      %1134 = vmatprep.subr.mxu0 0.0
      %1135 = vmatpush1.msra.mxu0 %v1084
      %1136 = vmatprep.subr.mxu0 0.0
      %1137 = vmatpush1.msra.mxu0 %v1083
      %1138 = vmatprep.subr.mxu0 0.0
      %1139 = vmatpush1.msra.mxu0 %v1082
      %1140 = vmatprep.subr.mxu0 0.0
      %1141 = vmatpush1.msra.mxu0 %v1081
      %1142 = vmatprep.subr.mxu0 0.0
      %1143 = vmatpush1.msra.mxu0 %v1080
      %1144 = vmatprep.subr.mxu0 0.0
      %1145 = vmatpush2.msra.mxu0 %v1111
      %1146 = vmatprep.subr.mxu0 0.0
      %1147 = vmatpush2.msra.mxu0 %v1110
      %1148 = vmatprep.subr.mxu0 0.0
      %1149 = vmatpush2.msra.mxu0 %v1109
      %1150 = vmatprep.subr.mxu0 0.0
      %1151 = vmatpush2.msra.mxu0 %v1108
      %1152 = vmatprep.subr.mxu0 0.0
      %1153 = vmatpush2.msra.mxu0 %v1107
      %1154 = vmatprep.subr.mxu0 0.0
      %1155 = vmatpush2.msra.mxu0 %v1106
      %1156 = vmatprep.subr.mxu0 0.0
      %1157 = vmatpush2.msra.mxu0 %v1105
      %1158 = vmatprep.subr.mxu0 0.0
      %1159 = vmatpush2.msra.mxu0 %v1104
      %1160 = vmatprep.subr.mxu0 0.0
      %1161 = vmatpush2.msra.mxu0 %v1103
      %1162 = vmatprep.subr.mxu0 0.0
      %1163 = vmatpush2.msra.mxu0 %v1102
      %1164 = vmatprep.subr.mxu0 0.0
      %1165 = vmatpush2.msra.mxu0 %v1101
      %1166 = vmatprep.subr.mxu0 0.0
      %1167 = vmatpush2.msra.mxu0 %v1100
      %1168 = vmatprep.subr.mxu0 0.0
      %1169 = vmatpush2.msra.mxu0 %v1099
      %1170 = vmatprep.subr.mxu0 0.0
      %1171 = vmatpush2.msra.mxu0 %v1098
      %1172 = vmatprep.subr.mxu0 0.0
      %1173 = vmatpush2.msra.mxu0 %v1097
      %1174 = vmatprep.subr.mxu0 0.0
      %1175 = vmatpush2.msra.mxu0 %v1096
      %1176 = vmatprep.mubr.f32.mxu0 %v720
      %1177 = vmatmul.mubr.f32.gmra.mxu0 %v719
      %v1178 = vpop.f32.mrf.mxu0
      %v1179 = vadd.f32 0.0, %v1178
      %v1180 = vpop.f32.mrf.mxu0
      %1181 = vdwg.mxu0
      %1182 = vmatprep.subr.mxu0 0.0
      %1183 = vmatpush1.msra.mxu0 %v1063
      %1184 = vmatprep.subr.mxu0 0.0
      %1185 = vmatpush1.msra.mxu0 %v1062
      %1186 = vmatprep.subr.mxu0 0.0
      %1187 = vmatpush1.msra.mxu0 %v1061
      %1188 = vmatprep.subr.mxu0 0.0
      %1189 = vmatpush1.msra.mxu0 %v1060
      %1190 = vmatprep.subr.mxu0 0.0
      %1191 = vmatpush1.msra.mxu0 %v1059
      %1192 = vmatprep.subr.mxu0 0.0
      %1193 = vmatpush1.msra.mxu0 %v1058
      %1194 = vmatprep.subr.mxu0 0.0
      %1195 = vmatpush1.msra.mxu0 %v1057
      %1196 = vmatprep.subr.mxu0 0.0
      %1197 = vmatpush1.msra.mxu0 %v1056
      %1198 = vmatprep.subr.mxu0 0.0
      %1199 = vmatpush1.msra.mxu0 %v1055
      %1200 = vmatprep.subr.mxu0 0.0
      %1201 = vmatpush1.msra.mxu0 %v1054
      %1202 = vmatprep.subr.mxu0 0.0
      %1203 = vmatpush1.msra.mxu0 %v1053
      %1204 = vmatprep.subr.mxu0 0.0
      %1205 = vmatpush1.msra.mxu0 %v1052
      %1206 = vmatprep.subr.mxu0 0.0
      %1207 = vmatpush1.msra.mxu0 %v1051
      %1208 = vmatprep.subr.mxu0 0.0
      %1209 = vmatpush1.msra.mxu0 %v1050
      %1210 = vmatprep.subr.mxu0 0.0
      %1211 = vmatpush1.msra.mxu0 %v1049
      %1212 = vmatprep.subr.mxu0 0.0
      %1213 = vmatpush1.msra.mxu0 %v1048
      %1214 = vmatprep.subr.mxu0 0.0
      %1215 = vmatpush2.msra.mxu0 %v1079
      %1216 = vmatprep.subr.mxu0 0.0
      %1217 = vmatpush2.msra.mxu0 %v1078
      %1218 = vmatprep.subr.mxu0 0.0
      %1219 = vmatpush2.msra.mxu0 %v1077
      %1220 = vmatprep.subr.mxu0 0.0
      %1221 = vmatpush2.msra.mxu0 %v1076
      %1222 = vmatprep.subr.mxu0 0.0
      %1223 = vmatpush2.msra.mxu0 %v1075
      %1224 = vmatprep.subr.mxu0 0.0
      %1225 = vmatpush2.msra.mxu0 %v1074
      %1226 = vmatprep.subr.mxu0 0.0
      %1227 = vmatpush2.msra.mxu0 %v1073
      %1228 = vmatprep.subr.mxu0 0.0
      %1229 = vmatpush2.msra.mxu0 %v1072
      %1230 = vmatprep.subr.mxu0 0.0
      %1231 = vmatpush2.msra.mxu0 %v1071
      %1232 = vmatprep.subr.mxu0 0.0
      %1233 = vmatpush2.msra.mxu0 %v1070
      %1234 = vmatprep.subr.mxu0 0.0
      %1235 = vmatpush2.msra.mxu0 %v1069
      %1236 = vmatprep.subr.mxu0 0.0
      %1237 = vmatpush2.msra.mxu0 %v1068
      %1238 = vmatprep.subr.mxu0 0.0
      %1239 = vmatpush2.msra.mxu0 %v1067
      %1240 = vmatprep.subr.mxu0 0.0
      %1241 = vmatpush2.msra.mxu0 %v1066
      %1242 = vmatprep.subr.mxu0 0.0
      %1243 = vmatpush2.msra.mxu0 %v1065
      %1244 = vmatprep.subr.mxu0 0.0
      %1245 = vmatpush2.msra.mxu0 %v1064
      %1246 = vmatprep.mubr.f32.mxu0 %v1047
      %1247 = vmatmul.mubr.f32.gmra.mxu0 %v1046
      %v1248 = vpop.f32.mrf.mxu0
      %v1249 = vadd.f32 %v1179, %v1248
      %v1250 = vpop.f32.mrf.mxu0
      %1251 = vdwg.mxu0
      %v1252 = vld [vmem:[%s8] sm:$0x1]
      %v1254 = vlaneseq
      %v1255 = vshrl.u32 %v1254, 7
      %v1256 = vsub.s32 0, %v1255
      %v1257 = vrot.slane %v1252, %v1256
      %v1259 = vadd.f32 %v1249, %v1257
      %v1260 = vmax.f32 %v1259, 0.0
      %1261 = vst [vmem:[#allocation16] sm:$0x3] %v1260
    $region73: #{tpu_custom_call.1} parent=1 // pred_fallthru
      _
    // Predicated region
    $region74: #{tpu_custom_call.1} parent=1 // pred_check
      _
    $region75: #{tpu_custom_call.1} parent=1 // pred_check_branch
      %1263 = sbr.rel (0) target = $region77
    $region76: #{tpu_custom_call.1} parent=1 // pred_region
      %s1265 = ssub.s32 32, 32
      %1266 = vsyncadd [#allocation6], %s1265
      %s1268 = sshll.u32 [#allocation16], 4
      %s1269 = int_to_ptr.vmem [resolvable:$true] %s1268
      %1271 = dma.vmem_to_hbm [thread:$0]  %s1269, 32, %s9, [#allocation6]
    $region77: #{tpu_custom_call.1} parent=1 // pred_fallthru
      _
    // Predicated region
    $region78: #{tpu_custom_call.1} parent=1 // pred_check
      _
    $region79: #{tpu_custom_call.1} parent=1 // pred_check_branch
      %1273 = sbr.rel (0) target = $region81
    $region80: #{tpu_custom_call.1} parent=1 // pred_region
      %1274 = dma.done [#allocation6], 32
    $region81: #{tpu_custom_call.1} parent=1 // pred_fallthru
      _
    %1275 = vsyncpa [#allocation5], 1
    %1276 = vsyncpa [#allocation8], 1
    %1277 = vsyncpa [#allocation11], 1
    %1278 = vsyncpa [#allocation14], 1
    %1279 = vsyncpa [#allocation6], 1

</llo_original>
